<compile_context>
chip_gen: v7x
topology: tpu7x:2x2x1
jax: 0.10.0
libtpu: 0.0.40
codegen_flags: <defaults>
</compile_context>

<pallas_src>
import functools

import jax
import jax.numpy as jnp
from jax.experimental import pallas as pl
from jax.experimental.pallas import tpu as pltpu


# ----------------------------- Pallas kernel ------------------------------- #

def _make_kernel(n_layers, window, batch_tile, in_dim, hid_dim, out_dim,
                 flat_io, use_scratch):
    """Kernel with static layer count, fused-gate matmuls and an unrolled time loop.

    Ref order (inputs):
      0               : x            flat (W*bt, in_dim) if flat_io else (W, bt, in_dim)
      per layer (3)   : wih_slab     (F_in, 3H)   pre-transposed, gates r|z|n along lanes
                        whh_slab     (H, 3H)
                        bias_slab    (2, 3H)      row0 = gi bias, row1 = [0, 0, b_hn]
      1 + 3*n_layers  : fc_wT        (H, out_dim)
      2 + 3*n_layers  : fc_b         (1, out_dim)
    then: out_ref, optional seq scratch (W*bt, H) VMEM (only if use_scratch).
    """
    n_in = 1 + 3 * n_layers + 2
    H = hid_dim

    def kernel(*refs):
        x_ref = refs[0]
        fc_wT_ref = refs[1 + 3 * n_layers]
        fc_b_ref = refs[2 + 3 * n_layers]
        out_ref = refs[n_in]
        seq_ref = refs[n_in + 1] if use_scratch else None

        if flat_io:
            inp = x_ref[...]                                       # (W*bt, F) already flat
        else:
            inp = x_ref[...].reshape(window * batch_tile, in_dim)  # one relayout, off the chain

        for layer in range(n_layers):
            base = 1 + 3 * layer
            wih = refs[base + 0][...]      # (F_in, 3H)
            whh = refs[base + 1][...]      # (H, 3H)
            bias = refs[base + 2][...]     # (2, 3H)

            # Hoisted, gate-fused input projection over ALL timesteps: one matmul.
            gi = jnp.dot(inp, wih, preferred_element_type=jnp.float32) + bias[0:1, :]  # (W*bt, 3H)

            # b_hn broadcast hoisted out of the unrolled loop (no CSE of broadcast_in_dim).
            bhn_b = jnp.broadcast_to(bias[1:2, :], (batch_tile, 3 * H))                # (bt, 3H)

            # Sequential GRU recurrence, fully unrolled (window static & small).
            # One fused (bt,H)x(H,3H) MXU round trip per step on the serial chain;
            # lane slicing of the (bt,3H) result is cheap VPU work that overlaps.
            h = jnp.zeros((batch_tile, H), jnp.float32)
            outs = []
            for t in range(window):
                lo, hi = t * batch_tile, (t + 1) * batch_tile
                gh = jnp.dot(h, whh, preferred_element_type=jnp.float32) + bhn_b       # (bt, 3H)
                gi_t = gi[lo:hi, :]
                rz = jax.nn.sigmoid(gi_t[:, :2 * H] + gh[:, :2 * H])
                r = rz[:, :H]
                z = rz[:, H:]
                n = jnp.tanh(gi_t[:, 2 * H:] + r * gh[:, 2 * H:])
                h = (1.0 - z) * n + z * h
                if use_scratch:
                    seq_ref[lo:hi, :] = h       # fallback path for large W*bt*H
                else:
                    outs.append(h)              # stay in vregs, no VMEM round trip

            if use_scratch:
                inp = seq_ref[...]              # (W*bt, H) -> next layer / FC
            else:
                inp = jnp.concatenate(outs, axis=0)   # (W*bt, H), off the serial chain

        # Final Linear(hid_dim, out_dim): one batched matmul + one slab store.
        y = jnp.dot(inp, fc_wT_ref[...], preferred_element_type=jnp.float32) + fc_b_ref[...]
        if flat_io:
            out_ref[...] = y
        else:
            out_ref[...] = y.reshape(window, batch_tile, out_dim)

    return kernel


# ------------------------------- wrapper ----------------------------------- #

@functools.partial(
    jax.jit,
    static_argnames=("window_size", "hid_dim", "out_dim", "n_layers", "batch_tile"),
)
def reconstruction_model_forward(x, params, *, window_size, hid_dim, out_dim, n_layers,
                                 batch_tile=None):
    """Forward pass of ReconstructionModel. x: (B, in_dim) float32."""
    B, in_dim = x.shape
    if batch_tile is None:
        # Single grid step by default (v5e/v6e: one TensorCore, splitting is pure
        # overhead). On v7x with B >= 16, pass batch_tile = B // 2 (multiple of 8)
        # to shard the batch across the two TensorCores.
        batch_tile = B
    assert B % batch_tile == 0
    if batch_tile != B:
        assert batch_tile % 8 == 0, "batch_tile < B must be a multiple of 8 (sublane constraint)"
    H = hid_dim

    # Glue: replicate the exact repeat_interleave + view quirk of the PyTorch code.
    h_end_rep = jnp.repeat(x, window_size, axis=1).reshape(B, window_size, -1)   # (B, W, in_dim)
    x_tm = jnp.transpose(h_end_rep, (1, 0, 2)).astype(jnp.float32)               # (W, B, in_dim)

    flat_io = (batch_tile == B)
    # Keep the per-layer sequence in vregs while it is small; VMEM scratch otherwise.
    use_scratch = (window_size * batch_tile * hid_dim * 4) > (32 * 1024)

    # ---- pack parameters into a few slabs (3 per layer + 2 for the FC) ---- #
    weight_arrays = []
    for l in range(n_layers):
        w_ih, w_hh, b_ih, b_hh = params[f"gru_l{l}"]
        # PyTorch layout: (3H, F) rows ordered r, z, n -> transpose keeps gate grouping on lanes.
        wih_slab = jnp.transpose(w_ih).astype(jnp.float32)                        # (F_in, 3H)
        whh_slab = jnp.transpose(w_hh).astype(jnp.float32)                        # (H, 3H)
        gi_bias = jnp.concatenate([
            b_ih[0:H] + b_hh[0:H],            # b_r folded (goes through sigmoid unchanged)
            b_ih[H:2 * H] + b_hh[H:2 * H],    # b_z folded
            b_ih[2 * H:3 * H],                # b_in (b_hn must stay inside the r*(.) term)
        ])
        hn_bias = jnp.concatenate([jnp.zeros((2 * H,), jnp.float32), b_hh[2 * H:3 * H]])
        bias_slab = jnp.stack([gi_bias, hn_bias], axis=0).astype(jnp.float32)     # (2, 3H)
        weight_arrays += [wih_slab, whh_slab, bias_slab]
    weight_arrays += [jnp.transpose(params["fc_w"]).astype(jnp.float32),          # (H, out_dim)
                      params["fc_b"].reshape(1, -1).astype(jnp.float32)]          # (1, out_dim)

    # ---- specs ---- #
    grid = (B // batch_tile,)
    if flat_io:
        x_in = x_tm.reshape(window_size * B, in_dim)
        x_spec = pl.BlockSpec((window_size * B, in_dim), lambda i: (0, 0))
        out_shape = jax.ShapeDtypeStruct((window_size * B, out_dim), jnp.float32)
        out_spec = pl.BlockSpec((window_size * B, out_dim), lambda i: (0, 0))
    else:
        x_in = x_tm
        x_spec = pl.BlockSpec((window_size, batch_tile, in_dim), lambda i: (0, i, 0))
        out_shape = jax.ShapeDtypeStruct((window_size, B, out_dim), jnp.float32)
        out_spec = pl.BlockSpec((window_size, batch_tile, out_dim), lambda i: (0, i, 0))

    inputs = [x_in]
    in_specs = [x_spec]
    for a in weight_arrays:
        inputs.append(a)
        # Whole-array block, constant index across the batch grid (grid-invariant).
        in_specs.append(pl.BlockSpec(a.shape, lambda i, nd=a.ndim: (0,) * nd))

    scratch_shapes = (
        [pltpu.VMEM((window_size * batch_tile, hid_dim), jnp.float32)] if use_scratch else []
    )

    kernel = _make_kernel(n_layers, window_size, batch_tile, in_dim, hid_dim, out_dim,
                          flat_io, use_scratch)

    out = pl.pallas_call(
        kernel,
        out_shape=out_shape,
        grid=grid,
        in_specs=in_specs,
        out_specs=out_spec,
        scratch_shapes=scratch_shapes,
        compiler_params=pltpu.CompilerParams(dimension_semantics=("parallel",)),
    )(*inputs)

    if flat_io:
        out = out.reshape(window_size, B, out_dim)
    return jnp.transpose(out, (1, 0, 2))   # (B, W, out_dim)


# ------------------------ deterministic parameter init --------------------- #

def init_params(key, in_dim, hid_dim, out_dim, n_layers):
    params = {}
    k_gru = 1.0 / jnp.sqrt(jnp.float32(hid_dim))
    keys = jax.random.split(key, 4 * n_layers + 2)
    for l in range(n_layers):
        layer_in = in_dim if l == 0 else hid_dim
        kw = keys[4 * l: 4 * l + 4]
        params[f"gru_l{l}"] = (
            jax.random.uniform(kw[0], (3 * hid_dim, layer_in), jnp.float32, -k_gru, k_gru),
            jax.random.uniform(kw[1], (3 * hid_dim, hid_dim), jnp.float32, -k_gru, k_gru),
            jax.random.uniform(kw[2], (3 * hid_dim,), jnp.float32, -k_gru, k_gru),
            jax.random.uniform(kw[3], (3 * hid_dim,), jnp.float32, -k_gru, k_gru),
        )
    k_fc = 1.0 / jnp.sqrt(jnp.float32(hid_dim))
    params["fc_w"] = jax.random.uniform(keys[-2], (out_dim, hid_dim), jnp.float32, -k_fc, k_fc)
    params["fc_b"] = jax.random.uniform(keys[-1], (out_dim,), jnp.float32, -k_fc, k_fc)
    return params


# ------------------------- pure-JAX reference check ------------------------ #

def reference_forward(x, params, window_size, hid_dim, n_layers):
    B, in_dim = x.shape
    seq = jnp.repeat(x, window_size, axis=1).reshape(B, window_size, -1)
    for l in range(n_layers):
        w_ih, w_hh, b_ih, b_hh = params[f"gru_l{l}"]
        h = jnp.zeros((B, hid_dim), jnp.float32)
        outs = []
        for t in range(window_size):
            x_t = seq[:, t, :]
            gi = x_t @ w_ih.T + b_ih
            gh = h @ w_hh.T + b_hh
            r = jax.nn.sigmoid(gi[:, :hid_dim] + gh[:, :hid_dim])
            z = jax.nn.sigmoid(gi[:, hid_dim:2 * hid_dim] + gh[:, hid_dim:2 * hid_dim])
            n = jnp.tanh(gi[:, 2 * hid_dim:] + r * gh[:, 2 * hid_dim:])
            h = (1.0 - z) * n + z * h
            outs.append(h)
        seq = jnp.stack(outs, axis=1)
    return seq @ params["fc_w"].T + params["fc_b"]


# ----------------------------------- main ----------------------------------- #

if __name__ == "__main__":
    # Module hyperparameters (small, consistent with the forward pass).
    window_size = 8
    in_dim = 4
    hid_dim = 32
    out_dim = 4
    n_layers = 2
    # dropout = 0.2  (inter-layer dropout; identity at inference)

    key = jax.random.PRNGKey(0)
    k_x, k_p = jax.random.split(key)
    batch = 2
    x = jax.random.normal(k_x, (batch, in_dim), jnp.float32)

    params = init_params(k_p, in_dim, hid_dim, out_dim, n_layers)

    out = reconstruction_model_forward(
        x, params,
        window_size=window_size, hid_dim=hid_dim, out_dim=out_dim, n_layers=n_layers,
    )
    out = jax.block_until_ready(out)

    ref = reference_forward(x, params, window_size, hid_dim, n_layers)
    assert out.shape == (batch, window_size, out_dim), out.shape
    assert jnp.allclose(out, ref, atol=1e-5, rtol=1e-5), float(jnp.abs(out - ref).max())

    print("KERNEL_OK")
</pallas_src>

<mosaic_0001>
module attributes {stable_mosaic.version = 11 : i64} {
  func.func @kernel(%arg0: i32, %arg1: memref<16x4xf32, #tpu.memory_space<vmem>>, %arg2: memref<4x96xf32, #tpu.memory_space<vmem>>, %arg3: memref<32x96xf32, #tpu.memory_space<vmem>>, %arg4: memref<2x96xf32, #tpu.memory_space<vmem>>, %arg5: memref<32x96xf32, #tpu.memory_space<vmem>>, %arg6: memref<32x96xf32, #tpu.memory_space<vmem>>, %arg7: memref<2x96xf32, #tpu.memory_space<vmem>>, %arg8: memref<32x4xf32, #tpu.memory_space<vmem>>, %arg9: memref<1x4xf32, #tpu.memory_space<vmem>>, %arg10: memref<16x4xf32, #tpu.memory_space<vmem>>) attributes {dimension_semantics = [#tpu.dimension_semantics<parallel>], iteration_bounds = array<i64: 1>, scalar_prefetch = 0 : i64, scratch_operands = 0 : i64, tpu.core_type = #tpu.core_type<tc>, window_params = [{pipeline_mode = #tpu.pipeline_mode<synchronous>, transform_indices = @transform_0, window_bounds = array<i64: 16, 4>}, {pipeline_mode = #tpu.pipeline_mode<synchronous>, transform_indices = @transform_1, window_bounds = array<i64: 4, 96>}, {pipeline_mode = #tpu.pipeline_mode<synchronous>, transform_indices = @transform_2, window_bounds = array<i64: 32, 96>}, {pipeline_mode = #tpu.pipeline_mode<synchronous>, transform_indices = @transform_3, window_bounds = array<i64: 2, 96>}, {pipeline_mode = #tpu.pipeline_mode<synchronous>, transform_indices = @transform_4, window_bounds = array<i64: 32, 96>}, {pipeline_mode = #tpu.pipeline_mode<synchronous>, transform_indices = @transform_5, window_bounds = array<i64: 32, 96>}, {pipeline_mode = #tpu.pipeline_mode<synchronous>, transform_indices = @transform_6, window_bounds = array<i64: 2, 96>}, {pipeline_mode = #tpu.pipeline_mode<synchronous>, transform_indices = @transform_7, window_bounds = array<i64: 32, 4>}, {pipeline_mode = #tpu.pipeline_mode<synchronous>, transform_indices = @transform_8, window_bounds = array<i64: 1, 4>}, {pipeline_mode = #tpu.pipeline_mode<synchronous>, transform_indices = @transform_9, window_bounds = array<i64: 16, 4>}]} {
    %c0 = arith.constant 0 : index
    %c0_0 = arith.constant 0 : index
    %0 = vector.load %arg1[%c0, %c0_0] : memref<16x4xf32, #tpu.memory_space<vmem>>, vector<16x4xf32>
    %c0_1 = arith.constant 0 : index
    %c0_2 = arith.constant 0 : index
    %1 = vector.load %arg2[%c0_1, %c0_2] : memref<4x96xf32, #tpu.memory_space<vmem>>, vector<4x96xf32>
    %c0_3 = arith.constant 0 : index
    %c0_4 = arith.constant 0 : index
    %2 = vector.load %arg3[%c0_3, %c0_4] : memref<32x96xf32, #tpu.memory_space<vmem>>, vector<32x96xf32>
    %c0_5 = arith.constant 0 : index
    %c0_6 = arith.constant 0 : index
    %3 = vector.load %arg4[%c0_5, %c0_6] : memref<2x96xf32, #tpu.memory_space<vmem>>, vector<2x96xf32>
    %cst = arith.constant dense<0.000000e+00> : vector<16x96xf32>
    %4 = tpu.matmul %0, %1, %cst {dimension_numbers = #tpu.dot_dimension_numbers<[1], [0], [0], [1], [0, 0, 1, 1], [], []>} : vector<16x4xf32>, vector<4x96xf32>, vector<16x96xf32> -> vector<16x96xf32>
    %5 = vector.extract_strided_slice %3 {offsets = [0, 0], sizes = [1, 96], strides = [1, 1]} : vector<2x96xf32> to vector<1x96xf32>
    %6 = vector.broadcast %5 : vector<1x96xf32> to vector<16x96xf32>
    %7 = arith.addf %4, %6 : vector<16x96xf32>
    %8 = vector.extract_strided_slice %3 {offsets = [1, 0], sizes = [1, 96], strides = [1, 1]} : vector<2x96xf32> to vector<1x96xf32>
    %9 = vector.shape_cast %8 : vector<1x96xf32> to vector<1x96xf32>
    %10 = vector.broadcast %9 : vector<1x96xf32> to vector<2x96xf32>
    %cst_7 = arith.constant 0.000000e+00 : f32
    %11 = vector.broadcast %cst_7 : f32 to vector<2x32xf32>
    %cst_8 = arith.constant dense<0.000000e+00> : vector<2x96xf32>
    %12 = tpu.matmul %11, %2, %cst_8 {dimension_numbers = #tpu.dot_dimension_numbers<[1], [0], [0], [1], [0, 0, 1, 1], [], []>} : vector<2x32xf32>, vector<32x96xf32>, vector<2x96xf32> -> vector<2x96xf32>
    %13 = arith.addf %12, %10 : vector<2x96xf32>
    %14 = vector.extract_strided_slice %7 {offsets = [0, 0], sizes = [2, 96], strides = [1, 1]} : vector<16x96xf32> to vector<2x96xf32>
    %15 = vector.extract_strided_slice %14 {offsets = [0, 0], sizes = [2, 64], strides = [1, 1]} : vector<2x96xf32> to vector<2x64xf32>
    %16 = vector.extract_strided_slice %13 {offsets = [0, 0], sizes = [2, 64], strides = [1, 1]} : vector<2x96xf32> to vector<2x64xf32>
    %17 = arith.addf %15, %16 : vector<2x64xf32>
    %18 = arith.negf %17 : vector<2x64xf32>
    %19 = math.exp %18 : vector<2x64xf32>
    %cst_9 = arith.constant 1.000000e+00 : f32
    %20 = vector.broadcast %cst_9 : f32 to vector<2x64xf32>
    %21 = arith.addf %20, %19 : vector<2x64xf32>
    %22 = arith.divf %20, %21 : vector<2x64xf32>
    %23 = vector.extract_strided_slice %22 {offsets = [0, 0], sizes = [2, 32], strides = [1, 1]} : vector<2x64xf32> to vector<2x32xf32>
    %24 = vector.extract_strided_slice %22 {offsets = [0, 32], sizes = [2, 32], strides = [1, 1]} : vector<2x64xf32> to vector<2x32xf32>
    %25 = vector.extract_strided_slice %14 {offsets = [0, 64], sizes = [2, 32], strides = [1, 1]} : vector<2x96xf32> to vector<2x32xf32>
    %26 = vector.extract_strided_slice %13 {offsets = [0, 64], sizes = [2, 32], strides = [1, 1]} : vector<2x96xf32> to vector<2x32xf32>
    %27 = arith.mulf %23, %26 : vector<2x32xf32>
    %28 = arith.addf %25, %27 : vector<2x32xf32>
    %29 = math.tanh %28 : vector<2x32xf32>
    %cst_10 = arith.constant 1.000000e+00 : f32
    %30 = vector.broadcast %cst_10 : f32 to vector<2x32xf32>
    %31 = arith.subf %30, %24 : vector<2x32xf32>
    %32 = arith.mulf %31, %29 : vector<2x32xf32>
    %33 = arith.mulf %24, %11 : vector<2x32xf32>
    %34 = arith.addf %32, %33 : vector<2x32xf32>
    %cst_11 = arith.constant dense<0.000000e+00> : vector<2x96xf32>
    %35 = tpu.matmul %34, %2, %cst_11 {dimension_numbers = #tpu.dot_dimension_numbers<[1], [0], [0], [1], [0, 0, 1, 1], [], []>} : vector<2x32xf32>, vector<32x96xf32>, vector<2x96xf32> -> vector<2x96xf32>
    %36 = arith.addf %35, %10 : vector<2x96xf32>
    %37 = vector.extract_strided_slice %7 {offsets = [2, 0], sizes = [2, 96], strides = [1, 1]} : vector<16x96xf32> to vector<2x96xf32>
    %38 = vector.extract_strided_slice %37 {offsets = [0, 0], sizes = [2, 64], strides = [1, 1]} : vector<2x96xf32> to vector<2x64xf32>
    %39 = vector.extract_strided_slice %36 {offsets = [0, 0], sizes = [2, 64], strides = [1, 1]} : vector<2x96xf32> to vector<2x64xf32>
    %40 = arith.addf %38, %39 : vector<2x64xf32>
    %41 = arith.negf %40 : vector<2x64xf32>
    %42 = math.exp %41 : vector<2x64xf32>
    %cst_12 = arith.constant 1.000000e+00 : f32
    %43 = vector.broadcast %cst_12 : f32 to vector<2x64xf32>
    %44 = arith.addf %43, %42 : vector<2x64xf32>
    %45 = arith.divf %43, %44 : vector<2x64xf32>
    %46 = vector.extract_strided_slice %45 {offsets = [0, 0], sizes = [2, 32], strides = [1, 1]} : vector<2x64xf32> to vector<2x32xf32>
    %47 = vector.extract_strided_slice %45 {offsets = [0, 32], sizes = [2, 32], strides = [1, 1]} : vector<2x64xf32> to vector<2x32xf32>
    %48 = vector.extract_strided_slice %37 {offsets = [0, 64], sizes = [2, 32], strides = [1, 1]} : vector<2x96xf32> to vector<2x32xf32>
    %49 = vector.extract_strided_slice %36 {offsets = [0, 64], sizes = [2, 32], strides = [1, 1]} : vector<2x96xf32> to vector<2x32xf32>
    %50 = arith.mulf %46, %49 : vector<2x32xf32>
    %51 = arith.addf %48, %50 : vector<2x32xf32>
    %52 = math.tanh %51 : vector<2x32xf32>
    %cst_13 = arith.constant 1.000000e+00 : f32
    %53 = vector.broadcast %cst_13 : f32 to vector<2x32xf32>
    %54 = arith.subf %53, %47 : vector<2x32xf32>
    %55 = arith.mulf %54, %52 : vector<2x32xf32>
    %56 = arith.mulf %47, %34 : vector<2x32xf32>
    %57 = arith.addf %55, %56 : vector<2x32xf32>
    %cst_14 = arith.constant dense<0.000000e+00> : vector<2x96xf32>
    %58 = tpu.matmul %57, %2, %cst_14 {dimension_numbers = #tpu.dot_dimension_numbers<[1], [0], [0], [1], [0, 0, 1, 1], [], []>} : vector<2x32xf32>, vector<32x96xf32>, vector<2x96xf32> -> vector<2x96xf32>
    %59 = arith.addf %58, %10 : vector<2x96xf32>
    %60 = vector.extract_strided_slice %7 {offsets = [4, 0], sizes = [2, 96], strides = [1, 1]} : vector<16x96xf32> to vector<2x96xf32>
    %61 = vector.extract_strided_slice %60 {offsets = [0, 0], sizes = [2, 64], strides = [1, 1]} : vector<2x96xf32> to vector<2x64xf32>
    %62 = vector.extract_strided_slice %59 {offsets = [0, 0], sizes = [2, 64], strides = [1, 1]} : vector<2x96xf32> to vector<2x64xf32>
    %63 = arith.addf %61, %62 : vector<2x64xf32>
    %64 = arith.negf %63 : vector<2x64xf32>
    %65 = math.exp %64 : vector<2x64xf32>
    %cst_15 = arith.constant 1.000000e+00 : f32
    %66 = vector.broadcast %cst_15 : f32 to vector<2x64xf32>
    %67 = arith.addf %66, %65 : vector<2x64xf32>
    %68 = arith.divf %66, %67 : vector<2x64xf32>
    %69 = vector.extract_strided_slice %68 {offsets = [0, 0], sizes = [2, 32], strides = [1, 1]} : vector<2x64xf32> to vector<2x32xf32>
    %70 = vector.extract_strided_slice %68 {offsets = [0, 32], sizes = [2, 32], strides = [1, 1]} : vector<2x64xf32> to vector<2x32xf32>
    %71 = vector.extract_strided_slice %60 {offsets = [0, 64], sizes = [2, 32], strides = [1, 1]} : vector<2x96xf32> to vector<2x32xf32>
    %72 = vector.extract_strided_slice %59 {offsets = [0, 64], sizes = [2, 32], strides = [1, 1]} : vector<2x96xf32> to vector<2x32xf32>
    %73 = arith.mulf %69, %72 : vector<2x32xf32>
    %74 = arith.addf %71, %73 : vector<2x32xf32>
    %75 = math.tanh %74 : vector<2x32xf32>
    %cst_16 = arith.constant 1.000000e+00 : f32
    %76 = vector.broadcast %cst_16 : f32 to vector<2x32xf32>
    %77 = arith.subf %76, %70 : vector<2x32xf32>
    %78 = arith.mulf %77, %75 : vector<2x32xf32>
    %79 = arith.mulf %70, %57 : vector<2x32xf32>
    %80 = arith.addf %78, %79 : vector<2x32xf32>
    %cst_17 = arith.constant dense<0.000000e+00> : vector<2x96xf32>
    %81 = tpu.matmul %80, %2, %cst_17 {dimension_numbers = #tpu.dot_dimension_numbers<[1], [0], [0], [1], [0, 0, 1, 1], [], []>} : vector<2x32xf32>, vector<32x96xf32>, vector<2x96xf32> -> vector<2x96xf32>
    %82 = arith.addf %81, %10 : vector<2x96xf32>
    %83 = vector.extract_strided_slice %7 {offsets = [6, 0], sizes = [2, 96], strides = [1, 1]} : vector<16x96xf32> to vector<2x96xf32>
    %84 = vector.extract_strided_slice %83 {offsets = [0, 0], sizes = [2, 64], strides = [1, 1]} : vector<2x96xf32> to vector<2x64xf32>
    %85 = vector.extract_strided_slice %82 {offsets = [0, 0], sizes = [2, 64], strides = [1, 1]} : vector<2x96xf32> to vector<2x64xf32>
    %86 = arith.addf %84, %85 : vector<2x64xf32>
    %87 = arith.negf %86 : vector<2x64xf32>
    %88 = math.exp %87 : vector<2x64xf32>
    %cst_18 = arith.constant 1.000000e+00 : f32
    %89 = vector.broadcast %cst_18 : f32 to vector<2x64xf32>
    %90 = arith.addf %89, %88 : vector<2x64xf32>
    %91 = arith.divf %89, %90 : vector<2x64xf32>
    %92 = vector.extract_strided_slice %91 {offsets = [0, 0], sizes = [2, 32], strides = [1, 1]} : vector<2x64xf32> to vector<2x32xf32>
    %93 = vector.extract_strided_slice %91 {offsets = [0, 32], sizes = [2, 32], strides = [1, 1]} : vector<2x64xf32> to vector<2x32xf32>
    %94 = vector.extract_strided_slice %83 {offsets = [0, 64], sizes = [2, 32], strides = [1, 1]} : vector<2x96xf32> to vector<2x32xf32>
    %95 = vector.extract_strided_slice %82 {offsets = [0, 64], sizes = [2, 32], strides = [1, 1]} : vector<2x96xf32> to vector<2x32xf32>
    %96 = arith.mulf %92, %95 : vector<2x32xf32>
    %97 = arith.addf %94, %96 : vector<2x32xf32>
    %98 = math.tanh %97 : vector<2x32xf32>
    %cst_19 = arith.constant 1.000000e+00 : f32
    %99 = vector.broadcast %cst_19 : f32 to vector<2x32xf32>
    %100 = arith.subf %99, %93 : vector<2x32xf32>
    %101 = arith.mulf %100, %98 : vector<2x32xf32>
    %102 = arith.mulf %93, %80 : vector<2x32xf32>
    %103 = arith.addf %101, %102 : vector<2x32xf32>
    %cst_20 = arith.constant dense<0.000000e+00> : vector<2x96xf32>
    %104 = tpu.matmul %103, %2, %cst_20 {dimension_numbers = #tpu.dot_dimension_numbers<[1], [0], [0], [1], [0, 0, 1, 1], [], []>} : vector<2x32xf32>, vector<32x96xf32>, vector<2x96xf32> -> vector<2x96xf32>
    %105 = arith.addf %104, %10 : vector<2x96xf32>
    %106 = vector.extract_strided_slice %7 {offsets = [8, 0], sizes = [2, 96], strides = [1, 1]} : vector<16x96xf32> to vector<2x96xf32>
    %107 = vector.extract_strided_slice %106 {offsets = [0, 0], sizes = [2, 64], strides = [1, 1]} : vector<2x96xf32> to vector<2x64xf32>
    %108 = vector.extract_strided_slice %105 {offsets = [0, 0], sizes = [2, 64], strides = [1, 1]} : vector<2x96xf32> to vector<2x64xf32>
    %109 = arith.addf %107, %108 : vector<2x64xf32>
    %110 = arith.negf %109 : vector<2x64xf32>
    %111 = math.exp %110 : vector<2x64xf32>
    %cst_21 = arith.constant 1.000000e+00 : f32
    %112 = vector.broadcast %cst_21 : f32 to vector<2x64xf32>
    %113 = arith.addf %112, %111 : vector<2x64xf32>
    %114 = arith.divf %112, %113 : vector<2x64xf32>
    %115 = vector.extract_strided_slice %114 {offsets = [0, 0], sizes = [2, 32], strides = [1, 1]} : vector<2x64xf32> to vector<2x32xf32>
    %116 = vector.extract_strided_slice %114 {offsets = [0, 32], sizes = [2, 32], strides = [1, 1]} : vector<2x64xf32> to vector<2x32xf32>
    %117 = vector.extract_strided_slice %106 {offsets = [0, 64], sizes = [2, 32], strides = [1, 1]} : vector<2x96xf32> to vector<2x32xf32>
    %118 = vector.extract_strided_slice %105 {offsets = [0, 64], sizes = [2, 32], strides = [1, 1]} : vector<2x96xf32> to vector<2x32xf32>
    %119 = arith.mulf %115, %118 : vector<2x32xf32>
    %120 = arith.addf %117, %119 : vector<2x32xf32>
    %121 = math.tanh %120 : vector<2x32xf32>
    %cst_22 = arith.constant 1.000000e+00 : f32
    %122 = vector.broadcast %cst_22 : f32 to vector<2x32xf32>
    %123 = arith.subf %122, %116 : vector<2x32xf32>
    %124 = arith.mulf %123, %121 : vector<2x32xf32>
    %125 = arith.mulf %116, %103 : vector<2x32xf32>
    %126 = arith.addf %124, %125 : vector<2x32xf32>
    %cst_23 = arith.constant dense<0.000000e+00> : vector<2x96xf32>
    %127 = tpu.matmul %126, %2, %cst_23 {dimension_numbers = #tpu.dot_dimension_numbers<[1], [0], [0], [1], [0, 0, 1, 1], [], []>} : vector<2x32xf32>, vector<32x96xf32>, vector<2x96xf32> -> vector<2x96xf32>
    %128 = arith.addf %127, %10 : vector<2x96xf32>
    %129 = vector.extract_strided_slice %7 {offsets = [10, 0], sizes = [2, 96], strides = [1, 1]} : vector<16x96xf32> to vector<2x96xf32>
    %130 = vector.extract_strided_slice %129 {offsets = [0, 0], sizes = [2, 64], strides = [1, 1]} : vector<2x96xf32> to vector<2x64xf32>
    %131 = vector.extract_strided_slice %128 {offsets = [0, 0], sizes = [2, 64], strides = [1, 1]} : vector<2x96xf32> to vector<2x64xf32>
    %132 = arith.addf %130, %131 : vector<2x64xf32>
    %133 = arith.negf %132 : vector<2x64xf32>
    %134 = math.exp %133 : vector<2x64xf32>
    %cst_24 = arith.constant 1.000000e+00 : f32
    %135 = vector.broadcast %cst_24 : f32 to vector<2x64xf32>
    %136 = arith.addf %135, %134 : vector<2x64xf32>
    %137 = arith.divf %135, %136 : vector<2x64xf32>
    %138 = vector.extract_strided_slice %137 {offsets = [0, 0], sizes = [2, 32], strides = [1, 1]} : vector<2x64xf32> to vector<2x32xf32>
    %139 = vector.extract_strided_slice %137 {offsets = [0, 32], sizes = [2, 32], strides = [1, 1]} : vector<2x64xf32> to vector<2x32xf32>
    %140 = vector.extract_strided_slice %129 {offsets = [0, 64], sizes = [2, 32], strides = [1, 1]} : vector<2x96xf32> to vector<2x32xf32>
    %141 = vector.extract_strided_slice %128 {offsets = [0, 64], sizes = [2, 32], strides = [1, 1]} : vector<2x96xf32> to vector<2x32xf32>
    %142 = arith.mulf %138, %141 : vector<2x32xf32>
    %143 = arith.addf %140, %142 : vector<2x32xf32>
    %144 = math.tanh %143 : vector<2x32xf32>
    %cst_25 = arith.constant 1.000000e+00 : f32
    %145 = vector.broadcast %cst_25 : f32 to vector<2x32xf32>
    %146 = arith.subf %145, %139 : vector<2x32xf32>
    %147 = arith.mulf %146, %144 : vector<2x32xf32>
    %148 = arith.mulf %139, %126 : vector<2x32xf32>
    %149 = arith.addf %147, %148 : vector<2x32xf32>
    %cst_26 = arith.constant dense<0.000000e+00> : vector<2x96xf32>
    %150 = tpu.matmul %149, %2, %cst_26 {dimension_numbers = #tpu.dot_dimension_numbers<[1], [0], [0], [1], [0, 0, 1, 1], [], []>} : vector<2x32xf32>, vector<32x96xf32>, vector<2x96xf32> -> vector<2x96xf32>
    %151 = arith.addf %150, %10 : vector<2x96xf32>
    %152 = vector.extract_strided_slice %7 {offsets = [12, 0], sizes = [2, 96], strides = [1, 1]} : vector<16x96xf32> to vector<2x96xf32>
    %153 = vector.extract_strided_slice %152 {offsets = [0, 0], sizes = [2, 64], strides = [1, 1]} : vector<2x96xf32> to vector<2x64xf32>
    %154 = vector.extract_strided_slice %151 {offsets = [0, 0], sizes = [2, 64], strides = [1, 1]} : vector<2x96xf32> to vector<2x64xf32>
    %155 = arith.addf %153, %154 : vector<2x64xf32>
    %156 = arith.negf %155 : vector<2x64xf32>
    %157 = math.exp %156 : vector<2x64xf32>
    %cst_27 = arith.constant 1.000000e+00 : f32
    %158 = vector.broadcast %cst_27 : f32 to vector<2x64xf32>
    %159 = arith.addf %158, %157 : vector<2x64xf32>
    %160 = arith.divf %158, %159 : vector<2x64xf32>
    %161 = vector.extract_strided_slice %160 {offsets = [0, 0], sizes = [2, 32], strides = [1, 1]} : vector<2x64xf32> to vector<2x32xf32>
    %162 = vector.extract_strided_slice %160 {offsets = [0, 32], sizes = [2, 32], strides = [1, 1]} : vector<2x64xf32> to vector<2x32xf32>
    %163 = vector.extract_strided_slice %152 {offsets = [0, 64], sizes = [2, 32], strides = [1, 1]} : vector<2x96xf32> to vector<2x32xf32>
    %164 = vector.extract_strided_slice %151 {offsets = [0, 64], sizes = [2, 32], strides = [1, 1]} : vector<2x96xf32> to vector<2x32xf32>
    %165 = arith.mulf %161, %164 : vector<2x32xf32>
    %166 = arith.addf %163, %165 : vector<2x32xf32>
    %167 = math.tanh %166 : vector<2x32xf32>
    %cst_28 = arith.constant 1.000000e+00 : f32
    %168 = vector.broadcast %cst_28 : f32 to vector<2x32xf32>
    %169 = arith.subf %168, %162 : vector<2x32xf32>
    %170 = arith.mulf %169, %167 : vector<2x32xf32>
    %171 = arith.mulf %162, %149 : vector<2x32xf32>
    %172 = arith.addf %170, %171 : vector<2x32xf32>
    %cst_29 = arith.constant dense<0.000000e+00> : vector<2x96xf32>
    %173 = tpu.matmul %172, %2, %cst_29 {dimension_numbers = #tpu.dot_dimension_numbers<[1], [0], [0], [1], [0, 0, 1, 1], [], []>} : vector<2x32xf32>, vector<32x96xf32>, vector<2x96xf32> -> vector<2x96xf32>
    %174 = arith.addf %173, %10 : vector<2x96xf32>
    %175 = vector.extract_strided_slice %7 {offsets = [14, 0], sizes = [2, 96], strides = [1, 1]} : vector<16x96xf32> to vector<2x96xf32>
    %176 = vector.extract_strided_slice %175 {offsets = [0, 0], sizes = [2, 64], strides = [1, 1]} : vector<2x96xf32> to vector<2x64xf32>
    %177 = vector.extract_strided_slice %174 {offsets = [0, 0], sizes = [2, 64], strides = [1, 1]} : vector<2x96xf32> to vector<2x64xf32>
    %178 = arith.addf %176, %177 : vector<2x64xf32>
    %179 = arith.negf %178 : vector<2x64xf32>
    %180 = math.exp %179 : vector<2x64xf32>
    %cst_30 = arith.constant 1.000000e+00 : f32
    %181 = vector.broadcast %cst_30 : f32 to vector<2x64xf32>
    %182 = arith.addf %181, %180 : vector<2x64xf32>
    %183 = arith.divf %181, %182 : vector<2x64xf32>
    %184 = vector.extract_strided_slice %183 {offsets = [0, 0], sizes = [2, 32], strides = [1, 1]} : vector<2x64xf32> to vector<2x32xf32>
    %185 = vector.extract_strided_slice %183 {offsets = [0, 32], sizes = [2, 32], strides = [1, 1]} : vector<2x64xf32> to vector<2x32xf32>
    %186 = vector.extract_strided_slice %175 {offsets = [0, 64], sizes = [2, 32], strides = [1, 1]} : vector<2x96xf32> to vector<2x32xf32>
    %187 = vector.extract_strided_slice %174 {offsets = [0, 64], sizes = [2, 32], strides = [1, 1]} : vector<2x96xf32> to vector<2x32xf32>
    %188 = arith.mulf %184, %187 : vector<2x32xf32>
    %189 = arith.addf %186, %188 : vector<2x32xf32>
    %190 = math.tanh %189 : vector<2x32xf32>
    %cst_31 = arith.constant 1.000000e+00 : f32
    %191 = vector.broadcast %cst_31 : f32 to vector<2x32xf32>
    %192 = arith.subf %191, %185 : vector<2x32xf32>
    %193 = arith.mulf %192, %190 : vector<2x32xf32>
    %194 = arith.mulf %185, %172 : vector<2x32xf32>
    %195 = arith.addf %193, %194 : vector<2x32xf32>
    %196 = tpu.concatenate %34, %57, %80, %103, %126, %149, %172, %195 in 0 : vector<2x32xf32>, vector<2x32xf32>, vector<2x32xf32>, vector<2x32xf32>, vector<2x32xf32>, vector<2x32xf32>, vector<2x32xf32>, vector<2x32xf32> -> vector<16x32xf32>
    %c0_32 = arith.constant 0 : index
    %c0_33 = arith.constant 0 : index
    %197 = vector.load %arg5[%c0_32, %c0_33] : memref<32x96xf32, #tpu.memory_space<vmem>>, vector<32x96xf32>
    %c0_34 = arith.constant 0 : index
    %c0_35 = arith.constant 0 : index
    %198 = vector.load %arg6[%c0_34, %c0_35] : memref<32x96xf32, #tpu.memory_space<vmem>>, vector<32x96xf32>
    %c0_36 = arith.constant 0 : index
    %c0_37 = arith.constant 0 : index
    %199 = vector.load %arg7[%c0_36, %c0_37] : memref<2x96xf32, #tpu.memory_space<vmem>>, vector<2x96xf32>
    %cst_38 = arith.constant dense<0.000000e+00> : vector<16x96xf32>
    %200 = tpu.matmul %196, %197, %cst_38 {dimension_numbers = #tpu.dot_dimension_numbers<[1], [0], [0], [1], [0, 0, 1, 1], [], []>} : vector<16x32xf32>, vector<32x96xf32>, vector<16x96xf32> -> vector<16x96xf32>
    %201 = vector.extract_strided_slice %199 {offsets = [0, 0], sizes = [1, 96], strides = [1, 1]} : vector<2x96xf32> to vector<1x96xf32>
    %202 = vector.broadcast %201 : vector<1x96xf32> to vector<16x96xf32>
    %203 = arith.addf %200, %202 : vector<16x96xf32>
    %204 = vector.extract_strided_slice %199 {offsets = [1, 0], sizes = [1, 96], strides = [1, 1]} : vector<2x96xf32> to vector<1x96xf32>
    %205 = vector.shape_cast %204 : vector<1x96xf32> to vector<1x96xf32>
    %206 = vector.broadcast %205 : vector<1x96xf32> to vector<2x96xf32>
    %cst_39 = arith.constant 0.000000e+00 : f32
    %207 = vector.broadcast %cst_39 : f32 to vector<2x32xf32>
    %cst_40 = arith.constant dense<0.000000e+00> : vector<2x96xf32>
    %208 = tpu.matmul %207, %198, %cst_40 {dimension_numbers = #tpu.dot_dimension_numbers<[1], [0], [0], [1], [0, 0, 1, 1], [], []>} : vector<2x32xf32>, vector<32x96xf32>, vector<2x96xf32> -> vector<2x96xf32>
    %209 = arith.addf %208, %206 : vector<2x96xf32>
    %210 = vector.extract_strided_slice %203 {offsets = [0, 0], sizes = [2, 96], strides = [1, 1]} : vector<16x96xf32> to vector<2x96xf32>
    %211 = vector.extract_strided_slice %210 {offsets = [0, 0], sizes = [2, 64], strides = [1, 1]} : vector<2x96xf32> to vector<2x64xf32>
    %212 = vector.extract_strided_slice %209 {offsets = [0, 0], sizes = [2, 64], strides = [1, 1]} : vector<2x96xf32> to vector<2x64xf32>
    %213 = arith.addf %211, %212 : vector<2x64xf32>
    %214 = arith.negf %213 : vector<2x64xf32>
    %215 = math.exp %214 : vector<2x64xf32>
    %cst_41 = arith.constant 1.000000e+00 : f32
    %216 = vector.broadcast %cst_41 : f32 to vector<2x64xf32>
    %217 = arith.addf %216, %215 : vector<2x64xf32>
    %218 = arith.divf %216, %217 : vector<2x64xf32>
    %219 = vector.extract_strided_slice %218 {offsets = [0, 0], sizes = [2, 32], strides = [1, 1]} : vector<2x64xf32> to vector<2x32xf32>
    %220 = vector.extract_strided_slice %218 {offsets = [0, 32], sizes = [2, 32], strides = [1, 1]} : vector<2x64xf32> to vector<2x32xf32>
    %221 = vector.extract_strided_slice %210 {offsets = [0, 64], sizes = [2, 32], strides = [1, 1]} : vector<2x96xf32> to vector<2x32xf32>
    %222 = vector.extract_strided_slice %209 {offsets = [0, 64], sizes = [2, 32], strides = [1, 1]} : vector<2x96xf32> to vector<2x32xf32>
    %223 = arith.mulf %219, %222 : vector<2x32xf32>
    %224 = arith.addf %221, %223 : vector<2x32xf32>
    %225 = math.tanh %224 : vector<2x32xf32>
    %cst_42 = arith.constant 1.000000e+00 : f32
    %226 = vector.broadcast %cst_42 : f32 to vector<2x32xf32>
    %227 = arith.subf %226, %220 : vector<2x32xf32>
    %228 = arith.mulf %227, %225 : vector<2x32xf32>
    %229 = arith.mulf %220, %207 : vector<2x32xf32>
    %230 = arith.addf %228, %229 : vector<2x32xf32>
    %cst_43 = arith.constant dense<0.000000e+00> : vector<2x96xf32>
    %231 = tpu.matmul %230, %198, %cst_43 {dimension_numbers = #tpu.dot_dimension_numbers<[1], [0], [0], [1], [0, 0, 1, 1], [], []>} : vector<2x32xf32>, vector<32x96xf32>, vector<2x96xf32> -> vector<2x96xf32>
    %232 = arith.addf %231, %206 : vector<2x96xf32>
    %233 = vector.extract_strided_slice %203 {offsets = [2, 0], sizes = [2, 96], strides = [1, 1]} : vector<16x96xf32> to vector<2x96xf32>
    %234 = vector.extract_strided_slice %233 {offsets = [0, 0], sizes = [2, 64], strides = [1, 1]} : vector<2x96xf32> to vector<2x64xf32>
    %235 = vector.extract_strided_slice %232 {offsets = [0, 0], sizes = [2, 64], strides = [1, 1]} : vector<2x96xf32> to vector<2x64xf32>
    %236 = arith.addf %234, %235 : vector<2x64xf32>
    %237 = arith.negf %236 : vector<2x64xf32>
    %238 = math.exp %237 : vector<2x64xf32>
    %cst_44 = arith.constant 1.000000e+00 : f32
    %239 = vector.broadcast %cst_44 : f32 to vector<2x64xf32>
    %240 = arith.addf %239, %238 : vector<2x64xf32>
    %241 = arith.divf %239, %240 : vector<2x64xf32>
    %242 = vector.extract_strided_slice %241 {offsets = [0, 0], sizes = [2, 32], strides = [1, 1]} : vector<2x64xf32> to vector<2x32xf32>
    %243 = vector.extract_strided_slice %241 {offsets = [0, 32], sizes = [2, 32], strides = [1, 1]} : vector<2x64xf32> to vector<2x32xf32>
    %244 = vector.extract_strided_slice %233 {offsets = [0, 64], sizes = [2, 32], strides = [1, 1]} : vector<2x96xf32> to vector<2x32xf32>
    %245 = vector.extract_strided_slice %232 {offsets = [0, 64], sizes = [2, 32], strides = [1, 1]} : vector<2x96xf32> to vector<2x32xf32>
    %246 = arith.mulf %242, %245 : vector<2x32xf32>
    %247 = arith.addf %244, %246 : vector<2x32xf32>
    %248 = math.tanh %247 : vector<2x32xf32>
    %cst_45 = arith.constant 1.000000e+00 : f32
    %249 = vector.broadcast %cst_45 : f32 to vector<2x32xf32>
    %250 = arith.subf %249, %243 : vector<2x32xf32>
    %251 = arith.mulf %250, %248 : vector<2x32xf32>
    %252 = arith.mulf %243, %230 : vector<2x32xf32>
    %253 = arith.addf %251, %252 : vector<2x32xf32>
    %cst_46 = arith.constant dense<0.000000e+00> : vector<2x96xf32>
    %254 = tpu.matmul %253, %198, %cst_46 {dimension_numbers = #tpu.dot_dimension_numbers<[1], [0], [0], [1], [0, 0, 1, 1], [], []>} : vector<2x32xf32>, vector<32x96xf32>, vector<2x96xf32> -> vector<2x96xf32>
    %255 = arith.addf %254, %206 : vector<2x96xf32>
    %256 = vector.extract_strided_slice %203 {offsets = [4, 0], sizes = [2, 96], strides = [1, 1]} : vector<16x96xf32> to vector<2x96xf32>
    %257 = vector.extract_strided_slice %256 {offsets = [0, 0], sizes = [2, 64], strides = [1, 1]} : vector<2x96xf32> to vector<2x64xf32>
    %258 = vector.extract_strided_slice %255 {offsets = [0, 0], sizes = [2, 64], strides = [1, 1]} : vector<2x96xf32> to vector<2x64xf32>
    %259 = arith.addf %257, %258 : vector<2x64xf32>
    %260 = arith.negf %259 : vector<2x64xf32>
    %261 = math.exp %260 : vector<2x64xf32>
    %cst_47 = arith.constant 1.000000e+00 : f32
    %262 = vector.broadcast %cst_47 : f32 to vector<2x64xf32>
    %263 = arith.addf %262, %261 : vector<2x64xf32>
    %264 = arith.divf %262, %263 : vector<2x64xf32>
    %265 = vector.extract_strided_slice %264 {offsets = [0, 0], sizes = [2, 32], strides = [1, 1]} : vector<2x64xf32> to vector<2x32xf32>
    %266 = vector.extract_strided_slice %264 {offsets = [0, 32], sizes = [2, 32], strides = [1, 1]} : vector<2x64xf32> to vector<2x32xf32>
    %267 = vector.extract_strided_slice %256 {offsets = [0, 64], sizes = [2, 32], strides = [1, 1]} : vector<2x96xf32> to vector<2x32xf32>
    %268 = vector.extract_strided_slice %255 {offsets = [0, 64], sizes = [2, 32], strides = [1, 1]} : vector<2x96xf32> to vector<2x32xf32>
    %269 = arith.mulf %265, %268 : vector<2x32xf32>
    %270 = arith.addf %267, %269 : vector<2x32xf32>
    %271 = math.tanh %270 : vector<2x32xf32>
    %cst_48 = arith.constant 1.000000e+00 : f32
    %272 = vector.broadcast %cst_48 : f32 to vector<2x32xf32>
    %273 = arith.subf %272, %266 : vector<2x32xf32>
    %274 = arith.mulf %273, %271 : vector<2x32xf32>
    %275 = arith.mulf %266, %253 : vector<2x32xf32>
    %276 = arith.addf %274, %275 : vector<2x32xf32>
    %cst_49 = arith.constant dense<0.000000e+00> : vector<2x96xf32>
    %277 = tpu.matmul %276, %198, %cst_49 {dimension_numbers = #tpu.dot_dimension_numbers<[1], [0], [0], [1], [0, 0, 1, 1], [], []>} : vector<2x32xf32>, vector<32x96xf32>, vector<2x96xf32> -> vector<2x96xf32>
    %278 = arith.addf %277, %206 : vector<2x96xf32>
    %279 = vector.extract_strided_slice %203 {offsets = [6, 0], sizes = [2, 96], strides = [1, 1]} : vector<16x96xf32> to vector<2x96xf32>
    %280 = vector.extract_strided_slice %279 {offsets = [0, 0], sizes = [2, 64], strides = [1, 1]} : vector<2x96xf32> to vector<2x64xf32>
    %281 = vector.extract_strided_slice %278 {offsets = [0, 0], sizes = [2, 64], strides = [1, 1]} : vector<2x96xf32> to vector<2x64xf32>
    %282 = arith.addf %280, %281 : vector<2x64xf32>
    %283 = arith.negf %282 : vector<2x64xf32>
    %284 = math.exp %283 : vector<2x64xf32>
    %cst_50 = arith.constant 1.000000e+00 : f32
    %285 = vector.broadcast %cst_50 : f32 to vector<2x64xf32>
    %286 = arith.addf %285, %284 : vector<2x64xf32>
    %287 = arith.divf %285, %286 : vector<2x64xf32>
    %288 = vector.extract_strided_slice %287 {offsets = [0, 0], sizes = [2, 32], strides = [1, 1]} : vector<2x64xf32> to vector<2x32xf32>
    %289 = vector.extract_strided_slice %287 {offsets = [0, 32], sizes = [2, 32], strides = [1, 1]} : vector<2x64xf32> to vector<2x32xf32>
    %290 = vector.extract_strided_slice %279 {offsets = [0, 64], sizes = [2, 32], strides = [1, 1]} : vector<2x96xf32> to vector<2x32xf32>
    %291 = vector.extract_strided_slice %278 {offsets = [0, 64], sizes = [2, 32], strides = [1, 1]} : vector<2x96xf32> to vector<2x32xf32>
    %292 = arith.mulf %288, %291 : vector<2x32xf32>
    %293 = arith.addf %290, %292 : vector<2x32xf32>
    %294 = math.tanh %293 : vector<2x32xf32>
    %cst_51 = arith.constant 1.000000e+00 : f32
    %295 = vector.broadcast %cst_51 : f32 to vector<2x32xf32>
    %296 = arith.subf %295, %289 : vector<2x32xf32>
    %297 = arith.mulf %296, %294 : vector<2x32xf32>
    %298 = arith.mulf %289, %276 : vector<2x32xf32>
    %299 = arith.addf %297, %298 : vector<2x32xf32>
    %cst_52 = arith.constant dense<0.000000e+00> : vector<2x96xf32>
    %300 = tpu.matmul %299, %198, %cst_52 {dimension_numbers = #tpu.dot_dimension_numbers<[1], [0], [0], [1], [0, 0, 1, 1], [], []>} : vector<2x32xf32>, vector<32x96xf32>, vector<2x96xf32> -> vector<2x96xf32>
    %301 = arith.addf %300, %206 : vector<2x96xf32>
    %302 = vector.extract_strided_slice %203 {offsets = [8, 0], sizes = [2, 96], strides = [1, 1]} : vector<16x96xf32> to vector<2x96xf32>
    %303 = vector.extract_strided_slice %302 {offsets = [0, 0], sizes = [2, 64], strides = [1, 1]} : vector<2x96xf32> to vector<2x64xf32>
    %304 = vector.extract_strided_slice %301 {offsets = [0, 0], sizes = [2, 64], strides = [1, 1]} : vector<2x96xf32> to vector<2x64xf32>
    %305 = arith.addf %303, %304 : vector<2x64xf32>
    %306 = arith.negf %305 : vector<2x64xf32>
    %307 = math.exp %306 : vector<2x64xf32>
    %cst_53 = arith.constant 1.000000e+00 : f32
    %308 = vector.broadcast %cst_53 : f32 to vector<2x64xf32>
    %309 = arith.addf %308, %307 : vector<2x64xf32>
    %310 = arith.divf %308, %309 : vector<2x64xf32>
    %311 = vector.extract_strided_slice %310 {offsets = [0, 0], sizes = [2, 32], strides = [1, 1]} : vector<2x64xf32> to vector<2x32xf32>
    %312 = vector.extract_strided_slice %310 {offsets = [0, 32], sizes = [2, 32], strides = [1, 1]} : vector<2x64xf32> to vector<2x32xf32>
    %313 = vector.extract_strided_slice %302 {offsets = [0, 64], sizes = [2, 32], strides = [1, 1]} : vector<2x96xf32> to vector<2x32xf32>
    %314 = vector.extract_strided_slice %301 {offsets = [0, 64], sizes = [2, 32], strides = [1, 1]} : vector<2x96xf32> to vector<2x32xf32>
    %315 = arith.mulf %311, %314 : vector<2x32xf32>
    %316 = arith.addf %313, %315 : vector<2x32xf32>
    %317 = math.tanh %316 : vector<2x32xf32>
    %cst_54 = arith.constant 1.000000e+00 : f32
    %318 = vector.broadcast %cst_54 : f32 to vector<2x32xf32>
    %319 = arith.subf %318, %312 : vector<2x32xf32>
    %320 = arith.mulf %319, %317 : vector<2x32xf32>
    %321 = arith.mulf %312, %299 : vector<2x32xf32>
    %322 = arith.addf %320, %321 : vector<2x32xf32>
    %cst_55 = arith.constant dense<0.000000e+00> : vector<2x96xf32>
    %323 = tpu.matmul %322, %198, %cst_55 {dimension_numbers = #tpu.dot_dimension_numbers<[1], [0], [0], [1], [0, 0, 1, 1], [], []>} : vector<2x32xf32>, vector<32x96xf32>, vector<2x96xf32> -> vector<2x96xf32>
    %324 = arith.addf %323, %206 : vector<2x96xf32>
    %325 = vector.extract_strided_slice %203 {offsets = [10, 0], sizes = [2, 96], strides = [1, 1]} : vector<16x96xf32> to vector<2x96xf32>
    %326 = vector.extract_strided_slice %325 {offsets = [0, 0], sizes = [2, 64], strides = [1, 1]} : vector<2x96xf32> to vector<2x64xf32>
    %327 = vector.extract_strided_slice %324 {offsets = [0, 0], sizes = [2, 64], strides = [1, 1]} : vector<2x96xf32> to vector<2x64xf32>
    %328 = arith.addf %326, %327 : vector<2x64xf32>
    %329 = arith.negf %328 : vector<2x64xf32>
    %330 = math.exp %329 : vector<2x64xf32>
    %cst_56 = arith.constant 1.000000e+00 : f32
    %331 = vector.broadcast %cst_56 : f32 to vector<2x64xf32>
    %332 = arith.addf %331, %330 : vector<2x64xf32>
    %333 = arith.divf %331, %332 : vector<2x64xf32>
    %334 = vector.extract_strided_slice %333 {offsets = [0, 0], sizes = [2, 32], strides = [1, 1]} : vector<2x64xf32> to vector<2x32xf32>
    %335 = vector.extract_strided_slice %333 {offsets = [0, 32], sizes = [2, 32], strides = [1, 1]} : vector<2x64xf32> to vector<2x32xf32>
    %336 = vector.extract_strided_slice %325 {offsets = [0, 64], sizes = [2, 32], strides = [1, 1]} : vector<2x96xf32> to vector<2x32xf32>
    %337 = vector.extract_strided_slice %324 {offsets = [0, 64], sizes = [2, 32], strides = [1, 1]} : vector<2x96xf32> to vector<2x32xf32>
    %338 = arith.mulf %334, %337 : vector<2x32xf32>
    %339 = arith.addf %336, %338 : vector<2x32xf32>
    %340 = math.tanh %339 : vector<2x32xf32>
    %cst_57 = arith.constant 1.000000e+00 : f32
    %341 = vector.broadcast %cst_57 : f32 to vector<2x32xf32>
    %342 = arith.subf %341, %335 : vector<2x32xf32>
    %343 = arith.mulf %342, %340 : vector<2x32xf32>
    %344 = arith.mulf %335, %322 : vector<2x32xf32>
    %345 = arith.addf %343, %344 : vector<2x32xf32>
    %cst_58 = arith.constant dense<0.000000e+00> : vector<2x96xf32>
    %346 = tpu.matmul %345, %198, %cst_58 {dimension_numbers = #tpu.dot_dimension_numbers<[1], [0], [0], [1], [0, 0, 1, 1], [], []>} : vector<2x32xf32>, vector<32x96xf32>, vector<2x96xf32> -> vector<2x96xf32>
    %347 = arith.addf %346, %206 : vector<2x96xf32>
    %348 = vector.extract_strided_slice %203 {offsets = [12, 0], sizes = [2, 96], strides = [1, 1]} : vector<16x96xf32> to vector<2x96xf32>
    %349 = vector.extract_strided_slice %348 {offsets = [0, 0], sizes = [2, 64], strides = [1, 1]} : vector<2x96xf32> to vector<2x64xf32>
    %350 = vector.extract_strided_slice %347 {offsets = [0, 0], sizes = [2, 64], strides = [1, 1]} : vector<2x96xf32> to vector<2x64xf32>
    %351 = arith.addf %349, %350 : vector<2x64xf32>
    %352 = arith.negf %351 : vector<2x64xf32>
    %353 = math.exp %352 : vector<2x64xf32>
    %cst_59 = arith.constant 1.000000e+00 : f32
    %354 = vector.broadcast %cst_59 : f32 to vector<2x64xf32>
    %355 = arith.addf %354, %353 : vector<2x64xf32>
    %356 = arith.divf %354, %355 : vector<2x64xf32>
    %357 = vector.extract_strided_slice %356 {offsets = [0, 0], sizes = [2, 32], strides = [1, 1]} : vector<2x64xf32> to vector<2x32xf32>
    %358 = vector.extract_strided_slice %356 {offsets = [0, 32], sizes = [2, 32], strides = [1, 1]} : vector<2x64xf32> to vector<2x32xf32>
    %359 = vector.extract_strided_slice %348 {offsets = [0, 64], sizes = [2, 32], strides = [1, 1]} : vector<2x96xf32> to vector<2x32xf32>
    %360 = vector.extract_strided_slice %347 {offsets = [0, 64], sizes = [2, 32], strides = [1, 1]} : vector<2x96xf32> to vector<2x32xf32>
    %361 = arith.mulf %357, %360 : vector<2x32xf32>
    %362 = arith.addf %359, %361 : vector<2x32xf32>
    %363 = math.tanh %362 : vector<2x32xf32>
    %cst_60 = arith.constant 1.000000e+00 : f32
    %364 = vector.broadcast %cst_60 : f32 to vector<2x32xf32>
    %365 = arith.subf %364, %358 : vector<2x32xf32>
    %366 = arith.mulf %365, %363 : vector<2x32xf32>
    %367 = arith.mulf %358, %345 : vector<2x32xf32>
    %368 = arith.addf %366, %367 : vector<2x32xf32>
    %cst_61 = arith.constant dense<0.000000e+00> : vector<2x96xf32>
    %369 = tpu.matmul %368, %198, %cst_61 {dimension_numbers = #tpu.dot_dimension_numbers<[1], [0], [0], [1], [0, 0, 1, 1], [], []>} : vector<2x32xf32>, vector<32x96xf32>, vector<2x96xf32> -> vector<2x96xf32>
    %370 = arith.addf %369, %206 : vector<2x96xf32>
    %371 = vector.extract_strided_slice %203 {offsets = [14, 0], sizes = [2, 96], strides = [1, 1]} : vector<16x96xf32> to vector<2x96xf32>
    %372 = vector.extract_strided_slice %371 {offsets = [0, 0], sizes = [2, 64], strides = [1, 1]} : vector<2x96xf32> to vector<2x64xf32>
    %373 = vector.extract_strided_slice %370 {offsets = [0, 0], sizes = [2, 64], strides = [1, 1]} : vector<2x96xf32> to vector<2x64xf32>
    %374 = arith.addf %372, %373 : vector<2x64xf32>
    %375 = arith.negf %374 : vector<2x64xf32>
    %376 = math.exp %375 : vector<2x64xf32>
    %cst_62 = arith.constant 1.000000e+00 : f32
    %377 = vector.broadcast %cst_62 : f32 to vector<2x64xf32>
    %378 = arith.addf %377, %376 : vector<2x64xf32>
    %379 = arith.divf %377, %378 : vector<2x64xf32>
    %380 = vector.extract_strided_slice %379 {offsets = [0, 0], sizes = [2, 32], strides = [1, 1]} : vector<2x64xf32> to vector<2x32xf32>
    %381 = vector.extract_strided_slice %379 {offsets = [0, 32], sizes = [2, 32], strides = [1, 1]} : vector<2x64xf32> to vector<2x32xf32>
    %382 = vector.extract_strided_slice %371 {offsets = [0, 64], sizes = [2, 32], strides = [1, 1]} : vector<2x96xf32> to vector<2x32xf32>
    %383 = vector.extract_strided_slice %370 {offsets = [0, 64], sizes = [2, 32], strides = [1, 1]} : vector<2x96xf32> to vector<2x32xf32>
    %384 = arith.mulf %380, %383 : vector<2x32xf32>
    %385 = arith.addf %382, %384 : vector<2x32xf32>
    %386 = math.tanh %385 : vector<2x32xf32>
    %cst_63 = arith.constant 1.000000e+00 : f32
    %387 = vector.broadcast %cst_63 : f32 to vector<2x32xf32>
    %388 = arith.subf %387, %381 : vector<2x32xf32>
    %389 = arith.mulf %388, %386 : vector<2x32xf32>
    %390 = arith.mulf %381, %368 : vector<2x32xf32>
    %391 = arith.addf %389, %390 : vector<2x32xf32>
    %392 = tpu.concatenate %230, %253, %276, %299, %322, %345, %368, %391 in 0 : vector<2x32xf32>, vector<2x32xf32>, vector<2x32xf32>, vector<2x32xf32>, vector<2x32xf32>, vector<2x32xf32>, vector<2x32xf32>, vector<2x32xf32> -> vector<16x32xf32>
    %c0_64 = arith.constant 0 : index
    %c0_65 = arith.constant 0 : index
    %393 = vector.load %arg8[%c0_64, %c0_65] : memref<32x4xf32, #tpu.memory_space<vmem>>, vector<32x4xf32>
    %cst_66 = arith.constant dense<0.000000e+00> : vector<16x4xf32>
    %394 = tpu.matmul %392, %393, %cst_66 {dimension_numbers = #tpu.dot_dimension_numbers<[1], [0], [0], [1], [0, 0, 1, 1], [], []>} : vector<16x32xf32>, vector<32x4xf32>, vector<16x4xf32> -> vector<16x4xf32>
    %c0_67 = arith.constant 0 : index
    %c0_68 = arith.constant 0 : index
    %395 = vector.load %arg9[%c0_67, %c0_68] : memref<1x4xf32, #tpu.memory_space<vmem>>, vector<1x4xf32>
    %396 = vector.broadcast %395 : vector<1x4xf32> to vector<16x4xf32>
    %397 = arith.addf %394, %396 : vector<16x4xf32>
    %c0_69 = arith.constant 0 : index
    %c0_70 = arith.constant 0 : index
    %398 = vector.load %arg10[%c0_69, %c0_70] : memref<16x4xf32, #tpu.memory_space<vmem>>, vector<16x4xf32>
    tpu.vector_store %arg10[%c0_69, %c0_70], %397 {strides = array<i32>} : memref<16x4xf32, #tpu.memory_space<vmem>>, vector<16x4xf32>,
    return
  }
  func.func @transform_0(%arg0: i32) -> (i32, i32) {
    %c0_i32 = arith.constant 0 : i32
    %c0_i32_0 = arith.constant 0 : i32
    %c0_i32_1 = arith.constant 0 : i32
    return %c0_i32, %c0_i32_0 : i32, i32
  }
  func.func @transform_1(%arg0: i32) -> (i32, i32) {
    %c0_i32 = arith.constant 0 : i32
    %c0_i32_0 = arith.constant 0 : i32
    %c0_i32_1 = arith.constant 0 : i32
    return %c0_i32, %c0_i32_0 : i32, i32
  }
  func.func @transform_2(%arg0: i32) -> (i32, i32) {
    %c0_i32 = arith.constant 0 : i32
    %c0_i32_0 = arith.constant 0 : i32
    %c0_i32_1 = arith.constant 0 : i32
    return %c0_i32, %c0_i32_0 : i32, i32
  }
  func.func @transform_3(%arg0: i32) -> (i32, i32) {
    %c0_i32 = arith.constant 0 : i32
    %c0_i32_0 = arith.constant 0 : i32
    %c0_i32_1 = arith.constant 0 : i32
    return %c0_i32, %c0_i32_0 : i32, i32
  }
  func.func @transform_4(%arg0: i32) -> (i32, i32) {
    %c0_i32 = arith.constant 0 : i32
    %c0_i32_0 = arith.constant 0 : i32
    %c0_i32_1 = arith.constant 0 : i32
    return %c0_i32, %c0_i32_0 : i32, i32
  }
  func.func @transform_5(%arg0: i32) -> (i32, i32) {
    %c0_i32 = arith.constant 0 : i32
    %c0_i32_0 = arith.constant 0 : i32
    %c0_i32_1 = arith.constant 0 : i32
    return %c0_i32, %c0_i32_0 : i32, i32
  }
  func.func @transform_6(%arg0: i32) -> (i32, i32) {
    %c0_i32 = arith.constant 0 : i32
    %c0_i32_0 = arith.constant 0 : i32
    %c0_i32_1 = arith.constant 0 : i32
    return %c0_i32, %c0_i32_0 : i32, i32
  }
  func.func @transform_7(%arg0: i32) -> (i32, i32) {
    %c0_i32 = arith.constant 0 : i32
    %c0_i32_0 = arith.constant 0 : i32
    %c0_i32_1 = arith.constant 0 : i32
    return %c0_i32, %c0_i32_0 : i32, i32
  }
  func.func @transform_8(%arg0: i32) -> (i32, i32) {
    %c0_i32 = arith.constant 0 : i32
    %c0_i32_0 = arith.constant 0 : i32
    %c0_i32_1 = arith.constant 0 : i32
    return %c0_i32, %c0_i32_0 : i32, i32
  }
  func.func @transform_9(%arg0: i32) -> (i32, i32) {
    %c0_i32 = arith.constant 0 : i32
    %c0_i32_0 = arith.constant 0 : i32
    %c0_i32_1 = arith.constant 0 : i32
    return %c0_i32, %c0_i32_0 : i32, i32
  }
}

</mosaic_0001>

<llo_original>
// kernel: reconstruction_model_forward.1
$region0: #{reconstruction_model_forward.1}
  #allocation0 [shape = 'u32[]', space=smem, size = 0x4, offset = 0x4, fixed_abs, tag = 'smem constant byte address 0x4 - core index']
  #allocation1 [shape = 'u32[144,128]{1,0:T(1,128)}', space=vmem, size = 0x12000, scoped, tag = 'internal scratch']
  %s0 = inlined_call_operand.vmem [shape: f32[16,4], index: 0, kind: input, shape index: {}]
  %s1 = inlined_call_operand.vmem [shape: f32[4,96], index: 1, kind: input, shape index: {}]
  %s2 = inlined_call_operand.vmem [shape: f32[32,96], index: 2, kind: input, shape index: {}]
  %s3 = inlined_call_operand.vmem [shape: f32[2,96], index: 3, kind: input, shape index: {}]
  %s4 = inlined_call_operand.vmem [shape: f32[32,96], index: 4, kind: input, shape index: {}]
  %s5 = inlined_call_operand.vmem [shape: f32[32,96], index: 5, kind: input, shape index: {}]
  %s6 = inlined_call_operand.vmem [shape: f32[2,96], index: 6, kind: input, shape index: {}]
  %s7 = inlined_call_operand.vmem [shape: f32[32,4], index: 7, kind: input, shape index: {}]
  %s8 = inlined_call_operand.vmem [shape: f32[1,4], index: 8, kind: input, shape index: {}]
  %s9 = inlined_call_operand.vmem [shape: f32[16,4], index: 9, kind: output, shape index: {}]
  %s10 = sld [smem:[#allocation0]]
  $region46: #{reconstruction_model_forward.1} parent=0
    _
  %s12 = ssub.s32 1, %s10
  %s13 = scalar_select 0, %s12, %s10
  // Predicated region
  $region2: #{reconstruction_model_forward.1} parent=0 // pred_check
    _
  $region3: #{reconstruction_model_forward.1} parent=0 // pred_check_branch
    %15 = sbr.rel (0) target = $region5
  $region4: #{reconstruction_model_forward.1} parent=0 // pred_region
    _
  $region5: #{reconstruction_model_forward.1} parent=0 // pred_fallthru
    _
  // Predicated region
  $region6: #{reconstruction_model_forward.1} parent=0 // pred_check
    _
  $region7: #{reconstruction_model_forward.1} parent=0 // pred_check_branch
    %17 = sbr.rel (0) target = $region9
  $region8: #{reconstruction_model_forward.1} parent=0 // pred_region
    _
  $region9: #{reconstruction_model_forward.1} parent=0 // pred_fallthru
    _
  // Predicated region
  $region10: #{reconstruction_model_forward.1} parent=0 // pred_check
    _
  $region11: #{reconstruction_model_forward.1} parent=0 // pred_check_branch
    %19 = sbr.rel (0) target = $region13
  $region12: #{reconstruction_model_forward.1} parent=0 // pred_region
    _
  $region13: #{reconstruction_model_forward.1} parent=0 // pred_fallthru
    _
  // Predicated region
  $region14: #{reconstruction_model_forward.1} parent=0 // pred_check
    _
  $region15: #{reconstruction_model_forward.1} parent=0 // pred_check_branch
    %21 = sbr.rel (0) target = $region17
  $region16: #{reconstruction_model_forward.1} parent=0 // pred_region
    _
  $region17: #{reconstruction_model_forward.1} parent=0 // pred_fallthru
    _
  // Predicated region
  $region18: #{reconstruction_model_forward.1} parent=0 // pred_check
    _
  $region19: #{reconstruction_model_forward.1} parent=0 // pred_check_branch
    %23 = sbr.rel (0) target = $region21
  $region20: #{reconstruction_model_forward.1} parent=0 // pred_region
    _
  $region21: #{reconstruction_model_forward.1} parent=0 // pred_fallthru
    _
  // Predicated region
  $region22: #{reconstruction_model_forward.1} parent=0 // pred_check
    _
  $region23: #{reconstruction_model_forward.1} parent=0 // pred_check_branch
    %25 = sbr.rel (0) target = $region25
  $region24: #{reconstruction_model_forward.1} parent=0 // pred_region
    _
  $region25: #{reconstruction_model_forward.1} parent=0 // pred_fallthru
    _
  // Predicated region
  $region26: #{reconstruction_model_forward.1} parent=0 // pred_check
    _
  $region27: #{reconstruction_model_forward.1} parent=0 // pred_check_branch
    %27 = sbr.rel (0) target = $region29
  $region28: #{reconstruction_model_forward.1} parent=0 // pred_region
    _
  $region29: #{reconstruction_model_forward.1} parent=0 // pred_fallthru
    _
  // Predicated region
  $region30: #{reconstruction_model_forward.1} parent=0 // pred_check
    _
  $region31: #{reconstruction_model_forward.1} parent=0 // pred_check_branch
    %29 = sbr.rel (0) target = $region33
  $region32: #{reconstruction_model_forward.1} parent=0 // pred_region
    _
  $region33: #{reconstruction_model_forward.1} parent=0 // pred_fallthru
    _
  // Predicated region
  $region34: #{reconstruction_model_forward.1} parent=0 // pred_check
    _
  $region35: #{reconstruction_model_forward.1} parent=0 // pred_check_branch
    %31 = sbr.rel (0) target = $region37
  $region36: #{reconstruction_model_forward.1} parent=0 // pred_region
    _
  $region37: #{reconstruction_model_forward.1} parent=0 // pred_fallthru
    _
  %v32 = vld [vmem:[%s0] sm:$0xff]
  %v33 = vld [vmem:[%s0 + $0x8] sm:$0xff]
  %v34 = vld [vmem:[%s1] sm:$0xf]
  %v35 = vld [vmem:[%s2] sm:$0xff]
  %v36 = vld [vmem:[%s2 + $0x8] sm:$0xff]
  %v37 = vld [vmem:[%s2 + $0x10] sm:$0xff]
  %v38 = vld [vmem:[%s2 + $0x18] sm:$0xff]
  %v39 = vld [vmem:[%s3] sm:$0x3]
  %v40 = vlaneseq
  %v41 = vshrl.u32 %v40, 7
  %v42 = vsub.s32 0, %v41
  %v43 = vrot.slane %v39, %v42
  %vm44 = vcmask 31744
  %v46 = vsel %vm44, %v32, 0
  %v49 = vsel %vm44, %v33, 0
  %vm51 = vcmask 1043456
  %v53 = vsel %vm51, %v34, 0
  %55 = vmatprep.subr.mxu0 0.0
  %56 = vmatpush1.msra.mxu0 %v53
  %57 = vmatprep.subr.mxu0 0.0
  %58 = vmatpush1.msra.mxu0 0.0
  %59 = vmatprep.subr.mxu0 0.0
  %60 = vmatpush1.msra.mxu0 0.0
  %61 = vmatprep.subr.mxu0 0.0
  %62 = vmatpush1.msra.mxu0 0.0
  %63 = vmatprep.subr.mxu0 0.0
  %64 = vmatpush1.msra.mxu0 0.0
  %65 = vmatprep.subr.mxu0 0.0
  %66 = vmatpush1.msra.mxu0 0.0
  %67 = vmatprep.subr.mxu0 0.0
  %68 = vmatpush1.msra.mxu0 0.0
  %69 = vmatprep.subr.mxu0 0.0
  %70 = vmatpush1.msra.mxu0 0.0
  %71 = vmatprep.subr.mxu0 0.0
  %72 = vmatpush1.msra.mxu0 0.0
  %73 = vmatprep.subr.mxu0 0.0
  %74 = vmatpush1.msra.mxu0 0.0
  %75 = vmatprep.subr.mxu0 0.0
  %76 = vmatpush1.msra.mxu0 0.0
  %77 = vmatprep.subr.mxu0 0.0
  %78 = vmatpush1.msra.mxu0 0.0
  %79 = vmatprep.subr.mxu0 0.0
  %80 = vmatpush1.msra.mxu0 0.0
  %81 = vmatprep.subr.mxu0 0.0
  %82 = vmatpush1.msra.mxu0 0.0
  %83 = vmatprep.subr.mxu0 0.0
  %84 = vmatpush1.msra.mxu0 0.0
  %85 = vmatprep.subr.mxu0 0.0
  %86 = vmatpush1.msra.mxu0 0.0
  %87 = vmatprep.subr.mxu0 0.0
  %88 = vmatpush1.msra.mxu0 0.0
  %89 = vmatprep.subr.mxu0 0.0
  %90 = vmatpush1.msra.mxu0 0.0
  %91 = vmatprep.subr.mxu0 0.0
  %92 = vmatpush1.msra.mxu0 0.0
  %93 = vmatprep.subr.mxu0 0.0
  %94 = vmatpush1.msra.mxu0 0.0
  %95 = vmatprep.subr.mxu0 0.0
  %96 = vmatpush1.msra.mxu0 0.0
  %97 = vmatprep.subr.mxu0 0.0
  %98 = vmatpush1.msra.mxu0 0.0
  %99 = vmatprep.subr.mxu0 0.0
  %100 = vmatpush1.msra.mxu0 0.0
  %101 = vmatprep.subr.mxu0 0.0
  %102 = vmatpush1.msra.mxu0 0.0
  %103 = vmatprep.subr.mxu0 0.0
  %104 = vmatpush1.msra.mxu0 0.0
  %105 = vmatprep.subr.mxu0 0.0
  %106 = vmatpush1.msra.mxu0 0.0
  %107 = vmatprep.subr.mxu0 0.0
  %108 = vmatpush1.msra.mxu0 0.0
  %109 = vmatprep.subr.mxu0 0.0
  %110 = vmatpush1.msra.mxu0 0.0
  %111 = vmatprep.subr.mxu0 0.0
  %112 = vmatpush1.msra.mxu0 0.0
  %113 = vmatprep.subr.mxu0 0.0
  %114 = vmatpush1.msra.mxu0 0.0
  %115 = vmatprep.subr.mxu0 0.0
  %116 = vmatpush1.msra.mxu0 0.0
  %117 = vmatprep.subr.mxu0 0.0
  %118 = vmatpush1.msra.mxu0 0.0
  %119 = vmatprep.mubr.f32.mxu0 0.0
  %120 = vmatmul.mubr.f32.gmra.mrb[0].mxu0 %v46
  %v121 = vpop.f32.mrb[0].mxu0
  %v122 = vadd.f32 %v43, %v121
  %v123 = vpop.f32.mrb[0].mxu0
  %124 = vmatprep.mubr.f32.mxu0 0.0
  %125 = vmatmul.mubr.f32.gmra.mrb[0].mxu0 %v49
  %v126 = vpop.f32.mrb[0].mxu0
  %v127 = vadd.f32 %v43, %v126
  %v128 = vpop.f32.mrb[0].mxu0
  %129 = vdwg.mxu0
  %v130 = vlaneseq
  %v131 = vshrl.u32 %v130, 7
  %v132 = vsub.s32 1, %v131
  %v133 = vrot.slane %v39, %v132
  %vm134 = vcmask 261120
  %v136 = vsel %vm134, 0.0, 0
  %138 = vmatprep.subr.mxu0 0.0
  %139 = vmatpush1.msra.mxu0 %v35
  %140 = vmatprep.subr.mxu0 0.0
  %141 = vmatpush1.msra.mxu0 %v36
  %142 = vmatprep.subr.mxu0 0.0
  %143 = vmatpush1.msra.mxu0 %v37
  %144 = vmatprep.subr.mxu0 0.0
  %145 = vmatpush1.msra.mxu0 %v38
  %146 = vmatprep.subr.mxu0 0.0
  %147 = vmatpush1.msra.mxu0 0.0
  %148 = vmatprep.subr.mxu0 0.0
  %149 = vmatpush1.msra.mxu0 0.0
  %150 = vmatprep.subr.mxu0 0.0
  %151 = vmatpush1.msra.mxu0 0.0
  %152 = vmatprep.subr.mxu0 0.0
  %153 = vmatpush1.msra.mxu0 0.0
  %154 = vmatprep.subr.mxu0 0.0
  %155 = vmatpush1.msra.mxu0 0.0
  %156 = vmatprep.subr.mxu0 0.0
  %157 = vmatpush1.msra.mxu0 0.0
  %158 = vmatprep.subr.mxu0 0.0
  %159 = vmatpush1.msra.mxu0 0.0
  %160 = vmatprep.subr.mxu0 0.0
  %161 = vmatpush1.msra.mxu0 0.0
  %162 = vmatprep.subr.mxu0 0.0
  %163 = vmatpush1.msra.mxu0 0.0
  %164 = vmatprep.subr.mxu0 0.0
  %165 = vmatpush1.msra.mxu0 0.0
  %166 = vmatprep.subr.mxu0 0.0
  %167 = vmatpush1.msra.mxu0 0.0
  %168 = vmatprep.subr.mxu0 0.0
  %169 = vmatpush1.msra.mxu0 0.0
  %170 = vmatprep.subr.mxu0 0.0
  %171 = vmatpush1.msra.mxu0 0.0
  %172 = vmatprep.subr.mxu0 0.0
  %173 = vmatpush1.msra.mxu0 0.0
  %174 = vmatprep.subr.mxu0 0.0
  %175 = vmatpush1.msra.mxu0 0.0
  %176 = vmatprep.subr.mxu0 0.0
  %177 = vmatpush1.msra.mxu0 0.0
  %178 = vmatprep.subr.mxu0 0.0
  %179 = vmatpush1.msra.mxu0 0.0
  %180 = vmatprep.subr.mxu0 0.0
  %181 = vmatpush1.msra.mxu0 0.0
  %182 = vmatprep.subr.mxu0 0.0
  %183 = vmatpush1.msra.mxu0 0.0
  %184 = vmatprep.subr.mxu0 0.0
  %185 = vmatpush1.msra.mxu0 0.0
  %186 = vmatprep.subr.mxu0 0.0
  %187 = vmatpush1.msra.mxu0 0.0
  %188 = vmatprep.subr.mxu0 0.0
  %189 = vmatpush1.msra.mxu0 0.0
  %190 = vmatprep.subr.mxu0 0.0
  %191 = vmatpush1.msra.mxu0 0.0
  %192 = vmatprep.subr.mxu0 0.0
  %193 = vmatpush1.msra.mxu0 0.0
  %194 = vmatprep.subr.mxu0 0.0
  %195 = vmatpush1.msra.mxu0 0.0
  %196 = vmatprep.subr.mxu0 0.0
  %197 = vmatpush1.msra.mxu0 0.0
  %198 = vmatprep.subr.mxu0 0.0
  %199 = vmatpush1.msra.mxu0 0.0
  %200 = vmatprep.subr.mxu0 0.0
  %201 = vmatpush1.msra.mxu0 0.0
  %202 = vmatprep.mubr.f32.mxu0 0.0
  %203 = vmatmul.mubr.f32.gmra.mrb[0].mxu0 %v136
  %v204 = vpop.f32.mrb[0].mxu0
  %v205 = vadd.f32 %v133, %v204
  %v206 = vpop.f32.mrb[0].mxu0
  %207 = vdwg.mxu0
  %v208 = vadd.f32 %v122, %v205
  %v209 = vxor.u32 %v208, 2147483648
  %v210 = vmul.f32 %v209, 1.442695
  %v211 = vpow.pop %v210
  %v212 = vadd.f32 %v211, 1.0
  %v213 = vrcp.pop %v212
  %v214 = vmul.f32 1.0, %v213
  %216 = vrot.lane.b32.xlu0 %v205, 64
  %v217 = vpop.permute.xlu0 %216
  %v219 = vmul.f32 %v214, %v217
  %221 = vrot.lane.b32.xlu0 %v219, 64
  %v222 = vpop.permute.xlu0 %221
  %v224 = vadd.f32 %v122, %v222
  %v225 = vtanh.pop %v224
  %v226 = vsub.f32 1.0, %v214
  %228 = vrot.lane.b32.xlu0 %v225, 96
  %v229 = vpop.permute.xlu0 %228
  %v231 = vmul.f32 %v226, %v229
  %v232 = vmul.f32 %v214, 0.0
  %v233 = vadd.f32 %v231, %v232
  %235 = vrot.lane.b32.xlu0 %v233, 96
  %v236 = vpop.permute.xlu0 %235
  %v237 = vsel %vm134, %v236, 0
  %239 = vmatprep.subr.mxu0 0.0
  %240 = vmatpush1.msra.mxu0 %v35
  %241 = vmatprep.subr.mxu0 0.0
  %242 = vmatpush1.msra.mxu0 %v36
  %243 = vmatprep.subr.mxu0 0.0
  %244 = vmatpush1.msra.mxu0 %v37
  %245 = vmatprep.subr.mxu0 0.0
  %246 = vmatpush1.msra.mxu0 %v38
  %247 = vmatprep.subr.mxu0 0.0
  %248 = vmatpush1.msra.mxu0 0.0
  %249 = vmatprep.subr.mxu0 0.0
  %250 = vmatpush1.msra.mxu0 0.0
  %251 = vmatprep.subr.mxu0 0.0
  %252 = vmatpush1.msra.mxu0 0.0
  %253 = vmatprep.subr.mxu0 0.0
  %254 = vmatpush1.msra.mxu0 0.0
  %255 = vmatprep.subr.mxu0 0.0
  %256 = vmatpush1.msra.mxu0 0.0
  %257 = vmatprep.subr.mxu0 0.0
  %258 = vmatpush1.msra.mxu0 0.0
  %259 = vmatprep.subr.mxu0 0.0
  %260 = vmatpush1.msra.mxu0 0.0
  %261 = vmatprep.subr.mxu0 0.0
  %262 = vmatpush1.msra.mxu0 0.0
  %263 = vmatprep.subr.mxu0 0.0
  %264 = vmatpush1.msra.mxu0 0.0
  %265 = vmatprep.subr.mxu0 0.0
  %266 = vmatpush1.msra.mxu0 0.0
  %267 = vmatprep.subr.mxu0 0.0
  %268 = vmatpush1.msra.mxu0 0.0
  %269 = vmatprep.subr.mxu0 0.0
  %270 = vmatpush1.msra.mxu0 0.0
  %271 = vmatprep.subr.mxu0 0.0
  %272 = vmatpush1.msra.mxu0 0.0
  %273 = vmatprep.subr.mxu0 0.0
  %274 = vmatpush1.msra.mxu0 0.0
  %275 = vmatprep.subr.mxu0 0.0
  %276 = vmatpush1.msra.mxu0 0.0
  %277 = vmatprep.subr.mxu0 0.0
  %278 = vmatpush1.msra.mxu0 0.0
  %279 = vmatprep.subr.mxu0 0.0
  %280 = vmatpush1.msra.mxu0 0.0
  %281 = vmatprep.subr.mxu0 0.0
  %282 = vmatpush1.msra.mxu0 0.0
  %283 = vmatprep.subr.mxu0 0.0
  %284 = vmatpush1.msra.mxu0 0.0
  %285 = vmatprep.subr.mxu0 0.0
  %286 = vmatpush1.msra.mxu0 0.0
  %287 = vmatprep.subr.mxu0 0.0
  %288 = vmatpush1.msra.mxu0 0.0
  %289 = vmatprep.subr.mxu0 0.0
  %290 = vmatpush1.msra.mxu0 0.0
  %291 = vmatprep.subr.mxu0 0.0
  %292 = vmatpush1.msra.mxu0 0.0
  %293 = vmatprep.subr.mxu0 0.0
  %294 = vmatpush1.msra.mxu0 0.0
  %295 = vmatprep.subr.mxu0 0.0
  %296 = vmatpush1.msra.mxu0 0.0
  %297 = vmatprep.subr.mxu0 0.0
  %298 = vmatpush1.msra.mxu0 0.0
  %299 = vmatprep.subr.mxu0 0.0
  %300 = vmatpush1.msra.mxu0 0.0
  %301 = vmatprep.subr.mxu0 0.0
  %302 = vmatpush1.msra.mxu0 0.0
  %303 = vmatprep.mubr.f32.mxu0 0.0
  %304 = vmatmul.mubr.f32.gmra.mrb[0].mxu0 %v237
  %v305 = vpop.f32.mrb[0].mxu0
  %v306 = vadd.f32 %v133, %v305
  %v307 = vpop.f32.mrb[0].mxu0
  %308 = vdwg.mxu0
  %v310 = vrot.slane %v306, 6
  %v312 = vadd.f32 %v122, %v310
  %v313 = vxor.u32 %v312, 2147483648
  %v314 = vmul.f32 %v313, 1.442695
  %v315 = vpow.pop %v314
  %v316 = vadd.f32 %v315, 1.0
  %v317 = vrcp.pop %v316
  %v318 = vmul.f32 1.0, %v317
  %319 = vrot.lane.b32.xlu0 %v310, 64
  %v320 = vpop.permute.xlu0 %319
  %v322 = vmul.f32 %v318, %v320
  %324 = vrot.lane.b32.xlu0 %v322, 64
  %v325 = vpop.permute.xlu0 %324
  %v327 = vadd.f32 %v122, %v325
  %v328 = vtanh.pop %v327
  %v329 = vsub.f32 1.0, %v318
  %331 = vrot.lane.b32.xlu0 %v328, 96
  %v332 = vpop.permute.xlu0 %331
  %v334 = vmul.f32 %v329, %v332
  %v335 = vrot.slane %v233, 6
  %v337 = vmul.f32 %v318, %v335
  %v338 = vadd.f32 %v334, %v337
  %v340 = vrot.slane %v338, 2
  %341 = vrot.lane.b32.xlu0 %v340, 96
  %v342 = vpop.permute.xlu0 %341
  %v343 = vsel %vm134, %v342, 0
  %345 = vmatprep.subr.mxu0 0.0
  %346 = vmatpush1.msra.mxu0 %v35
  %347 = vmatprep.subr.mxu0 0.0
  %348 = vmatpush1.msra.mxu0 %v36
  %349 = vmatprep.subr.mxu0 0.0
  %350 = vmatpush1.msra.mxu0 %v37
  %351 = vmatprep.subr.mxu0 0.0
  %352 = vmatpush1.msra.mxu0 %v38
  %353 = vmatprep.subr.mxu0 0.0
  %354 = vmatpush1.msra.mxu0 0.0
  %355 = vmatprep.subr.mxu0 0.0
  %356 = vmatpush1.msra.mxu0 0.0
  %357 = vmatprep.subr.mxu0 0.0
  %358 = vmatpush1.msra.mxu0 0.0
  %359 = vmatprep.subr.mxu0 0.0
  %360 = vmatpush1.msra.mxu0 0.0
  %361 = vmatprep.subr.mxu0 0.0
  %362 = vmatpush1.msra.mxu0 0.0
  %363 = vmatprep.subr.mxu0 0.0
  %364 = vmatpush1.msra.mxu0 0.0
  %365 = vmatprep.subr.mxu0 0.0
  %366 = vmatpush1.msra.mxu0 0.0
  %367 = vmatprep.subr.mxu0 0.0
  %368 = vmatpush1.msra.mxu0 0.0
  %369 = vmatprep.subr.mxu0 0.0
  %370 = vmatpush1.msra.mxu0 0.0
  %371 = vmatprep.subr.mxu0 0.0
  %372 = vmatpush1.msra.mxu0 0.0
  %373 = vmatprep.subr.mxu0 0.0
  %374 = vmatpush1.msra.mxu0 0.0
  %375 = vmatprep.subr.mxu0 0.0
  %376 = vmatpush1.msra.mxu0 0.0
  %377 = vmatprep.subr.mxu0 0.0
  %378 = vmatpush1.msra.mxu0 0.0
  %379 = vmatprep.subr.mxu0 0.0
  %380 = vmatpush1.msra.mxu0 0.0
  %381 = vmatprep.subr.mxu0 0.0
  %382 = vmatpush1.msra.mxu0 0.0
  %383 = vmatprep.subr.mxu0 0.0
  %384 = vmatpush1.msra.mxu0 0.0
  %385 = vmatprep.subr.mxu0 0.0
  %386 = vmatpush1.msra.mxu0 0.0
  %387 = vmatprep.subr.mxu0 0.0
  %388 = vmatpush1.msra.mxu0 0.0
  %389 = vmatprep.subr.mxu0 0.0
  %390 = vmatpush1.msra.mxu0 0.0
  %391 = vmatprep.subr.mxu0 0.0
  %392 = vmatpush1.msra.mxu0 0.0
  %393 = vmatprep.subr.mxu0 0.0
  %394 = vmatpush1.msra.mxu0 0.0
  %395 = vmatprep.subr.mxu0 0.0
  %396 = vmatpush1.msra.mxu0 0.0
  %397 = vmatprep.subr.mxu0 0.0
  %398 = vmatpush1.msra.mxu0 0.0
  %399 = vmatprep.subr.mxu0 0.0
  %400 = vmatpush1.msra.mxu0 0.0
  %401 = vmatprep.subr.mxu0 0.0
  %402 = vmatpush1.msra.mxu0 0.0
  %403 = vmatprep.subr.mxu0 0.0
  %404 = vmatpush1.msra.mxu0 0.0
  %405 = vmatprep.subr.mxu0 0.0
  %406 = vmatpush1.msra.mxu0 0.0
  %407 = vmatprep.subr.mxu0 0.0
  %408 = vmatpush1.msra.mxu0 0.0
  %409 = vmatprep.mubr.f32.mxu0 0.0
  %410 = vmatmul.mubr.f32.gmra.mrb[0].mxu0 %v343
  %v411 = vpop.f32.mrb[0].mxu0
  %v412 = vadd.f32 %v133, %v411
  %v413 = vpop.f32.mrb[0].mxu0
  %414 = vdwg.mxu0
  %v416 = vrot.slane %v412, 4
  %v418 = vadd.f32 %v122, %v416
  %v419 = vxor.u32 %v418, 2147483648
  %v420 = vmul.f32 %v419, 1.442695
  %v421 = vpow.pop %v420
  %v422 = vadd.f32 %v421, 1.0
  %v423 = vrcp.pop %v422
  %v424 = vmul.f32 1.0, %v423
  %425 = vrot.lane.b32.xlu0 %v416, 64
  %v426 = vpop.permute.xlu0 %425
  %v428 = vmul.f32 %v424, %v426
  %430 = vrot.lane.b32.xlu0 %v428, 64
  %v431 = vpop.permute.xlu0 %430
  %v433 = vadd.f32 %v122, %v431
  %v434 = vtanh.pop %v433
  %v435 = vsub.f32 1.0, %v424
  %437 = vrot.lane.b32.xlu0 %v434, 96
  %v438 = vpop.permute.xlu0 %437
  %v440 = vmul.f32 %v435, %v438
  %v441 = vrot.slane %v338, 6
  %v443 = vmul.f32 %v424, %v441
  %v444 = vadd.f32 %v440, %v443
  %v446 = vrot.slane %v444, 4
  %447 = vrot.lane.b32.xlu0 %v446, 96
  %v448 = vpop.permute.xlu0 %447
  %v449 = vsel %vm134, %v448, 0
  %451 = vmatprep.subr.mxu0 0.0
  %452 = vmatpush1.msra.mxu0 %v35
  %453 = vmatprep.subr.mxu0 0.0
  %454 = vmatpush1.msra.mxu0 %v36
  %455 = vmatprep.subr.mxu0 0.0
  %456 = vmatpush1.msra.mxu0 %v37
  %457 = vmatprep.subr.mxu0 0.0
  %458 = vmatpush1.msra.mxu0 %v38
  %459 = vmatprep.subr.mxu0 0.0
  %460 = vmatpush1.msra.mxu0 0.0
  %461 = vmatprep.subr.mxu0 0.0
  %462 = vmatpush1.msra.mxu0 0.0
  %463 = vmatprep.subr.mxu0 0.0
  %464 = vmatpush1.msra.mxu0 0.0
  %465 = vmatprep.subr.mxu0 0.0
  %466 = vmatpush1.msra.mxu0 0.0
  %467 = vmatprep.subr.mxu0 0.0
  %468 = vmatpush1.msra.mxu0 0.0
  %469 = vmatprep.subr.mxu0 0.0
  %470 = vmatpush1.msra.mxu0 0.0
  %471 = vmatprep.subr.mxu0 0.0
  %472 = vmatpush1.msra.mxu0 0.0
  %473 = vmatprep.subr.mxu0 0.0
  %474 = vmatpush1.msra.mxu0 0.0
  %475 = vmatprep.subr.mxu0 0.0
  %476 = vmatpush1.msra.mxu0 0.0
  %477 = vmatprep.subr.mxu0 0.0
  %478 = vmatpush1.msra.mxu0 0.0
  %479 = vmatprep.subr.mxu0 0.0
  %480 = vmatpush1.msra.mxu0 0.0
  %481 = vmatprep.subr.mxu0 0.0
  %482 = vmatpush1.msra.mxu0 0.0
  %483 = vmatprep.subr.mxu0 0.0
  %484 = vmatpush1.msra.mxu0 0.0
  %485 = vmatprep.subr.mxu0 0.0
  %486 = vmatpush1.msra.mxu0 0.0
  %487 = vmatprep.subr.mxu0 0.0
  %488 = vmatpush1.msra.mxu0 0.0
  %489 = vmatprep.subr.mxu0 0.0
  %490 = vmatpush1.msra.mxu0 0.0
  %491 = vmatprep.subr.mxu0 0.0
  %492 = vmatpush1.msra.mxu0 0.0
  %493 = vmatprep.subr.mxu0 0.0
  %494 = vmatpush1.msra.mxu0 0.0
  %495 = vmatprep.subr.mxu0 0.0
  %496 = vmatpush1.msra.mxu0 0.0
  %497 = vmatprep.subr.mxu0 0.0
  %498 = vmatpush1.msra.mxu0 0.0
  %499 = vmatprep.subr.mxu0 0.0
  %500 = vmatpush1.msra.mxu0 0.0
  %501 = vmatprep.subr.mxu0 0.0
  %502 = vmatpush1.msra.mxu0 0.0
  %503 = vmatprep.subr.mxu0 0.0
  %504 = vmatpush1.msra.mxu0 0.0
  %505 = vmatprep.subr.mxu0 0.0
  %506 = vmatpush1.msra.mxu0 0.0
  %507 = vmatprep.subr.mxu0 0.0
  %508 = vmatpush1.msra.mxu0 0.0
  %509 = vmatprep.subr.mxu0 0.0
  %510 = vmatpush1.msra.mxu0 0.0
  %511 = vmatprep.subr.mxu0 0.0
  %512 = vmatpush1.msra.mxu0 0.0
  %513 = vmatprep.subr.mxu0 0.0
  %514 = vmatpush1.msra.mxu0 0.0
  %515 = vmatprep.mubr.f32.mxu0 0.0
  %516 = vmatmul.mubr.f32.gmra.mrb[0].mxu0 %v449
  %v517 = vpop.f32.mrb[0].mxu0
  %v518 = vadd.f32 %v133, %v517
  %v519 = vpop.f32.mrb[0].mxu0
  %520 = vdwg.mxu0
  %v522 = vrot.slane %v518, 2
  %v524 = vadd.f32 %v122, %v522
  %v525 = vxor.u32 %v524, 2147483648
  %v526 = vmul.f32 %v525, 1.442695
  %v527 = vpow.pop %v526
  %v528 = vadd.f32 %v527, 1.0
  %v529 = vrcp.pop %v528
  %v530 = vmul.f32 1.0, %v529
  %531 = vrot.lane.b32.xlu0 %v522, 64
  %v532 = vpop.permute.xlu0 %531
  %v534 = vmul.f32 %v530, %v532
  %536 = vrot.lane.b32.xlu0 %v534, 64
  %v537 = vpop.permute.xlu0 %536
  %v539 = vadd.f32 %v122, %v537
  %v540 = vtanh.pop %v539
  %v541 = vsub.f32 1.0, %v530
  %543 = vrot.lane.b32.xlu0 %v540, 96
  %v544 = vpop.permute.xlu0 %543
  %v546 = vmul.f32 %v541, %v544
  %v547 = vrot.slane %v444, 6
  %v549 = vmul.f32 %v530, %v547
  %v550 = vadd.f32 %v546, %v549
  %v552 = vrot.slane %v550, 6
  %553 = vrot.lane.b32.xlu0 %v552, 96
  %v554 = vpop.permute.xlu0 %553
  %v555 = vsel %vm134, %v554, 0
  %557 = vmatprep.subr.mxu0 0.0
  %558 = vmatpush1.msra.mxu0 %v35
  %559 = vmatprep.subr.mxu0 0.0
  %560 = vmatpush1.msra.mxu0 %v36
  %561 = vmatprep.subr.mxu0 0.0
  %562 = vmatpush1.msra.mxu0 %v37
  %563 = vmatprep.subr.mxu0 0.0
  %564 = vmatpush1.msra.mxu0 %v38
  %565 = vmatprep.subr.mxu0 0.0
  %566 = vmatpush1.msra.mxu0 0.0
  %567 = vmatprep.subr.mxu0 0.0
  %568 = vmatpush1.msra.mxu0 0.0
  %569 = vmatprep.subr.mxu0 0.0
  %570 = vmatpush1.msra.mxu0 0.0
  %571 = vmatprep.subr.mxu0 0.0
  %572 = vmatpush1.msra.mxu0 0.0
  %573 = vmatprep.subr.mxu0 0.0
  %574 = vmatpush1.msra.mxu0 0.0
  %575 = vmatprep.subr.mxu0 0.0
  %576 = vmatpush1.msra.mxu0 0.0
  %577 = vmatprep.subr.mxu0 0.0
  %578 = vmatpush1.msra.mxu0 0.0
  %579 = vmatprep.subr.mxu0 0.0
  %580 = vmatpush1.msra.mxu0 0.0
  %581 = vmatprep.subr.mxu0 0.0
  %582 = vmatpush1.msra.mxu0 0.0
  %583 = vmatprep.subr.mxu0 0.0
  %584 = vmatpush1.msra.mxu0 0.0
  %585 = vmatprep.subr.mxu0 0.0
  %586 = vmatpush1.msra.mxu0 0.0
  %587 = vmatprep.subr.mxu0 0.0
  %588 = vmatpush1.msra.mxu0 0.0
  %589 = vmatprep.subr.mxu0 0.0
  %590 = vmatpush1.msra.mxu0 0.0
  %591 = vmatprep.subr.mxu0 0.0
  %592 = vmatpush1.msra.mxu0 0.0
  %593 = vmatprep.subr.mxu0 0.0
  %594 = vmatpush1.msra.mxu0 0.0
  %595 = vmatprep.subr.mxu0 0.0
  %596 = vmatpush1.msra.mxu0 0.0
  %597 = vmatprep.subr.mxu0 0.0
  %598 = vmatpush1.msra.mxu0 0.0
  %599 = vmatprep.subr.mxu0 0.0
  %600 = vmatpush1.msra.mxu0 0.0
  %601 = vmatprep.subr.mxu0 0.0
  %602 = vmatpush1.msra.mxu0 0.0
  %603 = vmatprep.subr.mxu0 0.0
  %604 = vmatpush1.msra.mxu0 0.0
  %605 = vmatprep.subr.mxu0 0.0
  %606 = vmatpush1.msra.mxu0 0.0
  %607 = vmatprep.subr.mxu0 0.0
  %608 = vmatpush1.msra.mxu0 0.0
  %609 = vmatprep.subr.mxu0 0.0
  %610 = vmatpush1.msra.mxu0 0.0
  %611 = vmatprep.subr.mxu0 0.0
  %612 = vmatpush1.msra.mxu0 0.0
  %613 = vmatprep.subr.mxu0 0.0
  %614 = vmatpush1.msra.mxu0 0.0
  %615 = vmatprep.subr.mxu0 0.0
  %616 = vmatpush1.msra.mxu0 0.0
  %617 = vmatprep.subr.mxu0 0.0
  %618 = vmatpush1.msra.mxu0 0.0
  %619 = vmatprep.subr.mxu0 0.0
  %620 = vmatpush1.msra.mxu0 0.0
  %621 = vmatprep.mubr.f32.mxu0 0.0
  %622 = vmatmul.mubr.f32.gmra.mrb[0].mxu0 %v555
  %v623 = vpop.f32.mrb[0].mxu0
  %v624 = vadd.f32 %v133, %v623
  %v625 = vpop.f32.mrb[0].mxu0
  %626 = vdwg.mxu0
  %v627 = vadd.f32 %v127, %v624
  %v628 = vxor.u32 %v627, 2147483648
  %v629 = vmul.f32 %v628, 1.442695
  %v630 = vpow.pop %v629
  %v631 = vadd.f32 %v630, 1.0
  %v632 = vrcp.pop %v631
  %v633 = vmul.f32 1.0, %v632
  %635 = vrot.lane.b32.xlu0 %v624, 64
  %v636 = vpop.permute.xlu0 %635
  %v638 = vmul.f32 %v633, %v636
  %640 = vrot.lane.b32.xlu0 %v638, 64
  %v641 = vpop.permute.xlu0 %640
  %v643 = vadd.f32 %v127, %v641
  %v644 = vtanh.pop %v643
  %v645 = vsub.f32 1.0, %v633
  %647 = vrot.lane.b32.xlu0 %v644, 96
  %v648 = vpop.permute.xlu0 %647
  %v650 = vmul.f32 %v645, %v648
  %v652 = vmul.f32 %v633, %v552
  %v653 = vadd.f32 %v650, %v652
  %655 = vrot.lane.b32.xlu0 %v653, 96
  %v656 = vpop.permute.xlu0 %655
  %v657 = vsel %vm134, %v656, 0
  %659 = vmatprep.subr.mxu0 0.0
  %660 = vmatpush1.msra.mxu0 %v35
  %661 = vmatprep.subr.mxu0 0.0
  %662 = vmatpush1.msra.mxu0 %v36
  %663 = vmatprep.subr.mxu0 0.0
  %664 = vmatpush1.msra.mxu0 %v37
  %665 = vmatprep.subr.mxu0 0.0
  %666 = vmatpush1.msra.mxu0 %v38
  %667 = vmatprep.subr.mxu0 0.0
  %668 = vmatpush1.msra.mxu0 0.0
  %669 = vmatprep.subr.mxu0 0.0
  %670 = vmatpush1.msra.mxu0 0.0
  %671 = vmatprep.subr.mxu0 0.0
  %672 = vmatpush1.msra.mxu0 0.0
  %673 = vmatprep.subr.mxu0 0.0
  %674 = vmatpush1.msra.mxu0 0.0
  %675 = vmatprep.subr.mxu0 0.0
  %676 = vmatpush1.msra.mxu0 0.0
  %677 = vmatprep.subr.mxu0 0.0
  %678 = vmatpush1.msra.mxu0 0.0
  %679 = vmatprep.subr.mxu0 0.0
  %680 = vmatpush1.msra.mxu0 0.0
  %681 = vmatprep.subr.mxu0 0.0
  %682 = vmatpush1.msra.mxu0 0.0
  %683 = vmatprep.subr.mxu0 0.0
  %684 = vmatpush1.msra.mxu0 0.0
  %685 = vmatprep.subr.mxu0 0.0
  %686 = vmatpush1.msra.mxu0 0.0
  %687 = vmatprep.subr.mxu0 0.0
  %688 = vmatpush1.msra.mxu0 0.0
  %689 = vmatprep.subr.mxu0 0.0
  %690 = vmatpush1.msra.mxu0 0.0
  %691 = vmatprep.subr.mxu0 0.0
  %692 = vmatpush1.msra.mxu0 0.0
  %693 = vmatprep.subr.mxu0 0.0
  %694 = vmatpush1.msra.mxu0 0.0
  %695 = vmatprep.subr.mxu0 0.0
  %696 = vmatpush1.msra.mxu0 0.0
  %697 = vmatprep.subr.mxu0 0.0
  %698 = vmatpush1.msra.mxu0 0.0
  %699 = vmatprep.subr.mxu0 0.0
  %700 = vmatpush1.msra.mxu0 0.0
  %701 = vmatprep.subr.mxu0 0.0
  %702 = vmatpush1.msra.mxu0 0.0
  %703 = vmatprep.subr.mxu0 0.0
  %704 = vmatpush1.msra.mxu0 0.0
  %705 = vmatprep.subr.mxu0 0.0
  %706 = vmatpush1.msra.mxu0 0.0
  %707 = vmatprep.subr.mxu0 0.0
  %708 = vmatpush1.msra.mxu0 0.0
  %709 = vmatprep.subr.mxu0 0.0
  %710 = vmatpush1.msra.mxu0 0.0
  %711 = vmatprep.subr.mxu0 0.0
  %712 = vmatpush1.msra.mxu0 0.0
  %713 = vmatprep.subr.mxu0 0.0
  %714 = vmatpush1.msra.mxu0 0.0
  %715 = vmatprep.subr.mxu0 0.0
  %716 = vmatpush1.msra.mxu0 0.0
  %717 = vmatprep.subr.mxu0 0.0
  %718 = vmatpush1.msra.mxu0 0.0
  %719 = vmatprep.subr.mxu0 0.0
  %720 = vmatpush1.msra.mxu0 0.0
  %721 = vmatprep.subr.mxu0 0.0
  %722 = vmatpush1.msra.mxu0 0.0
  %723 = vmatprep.mubr.f32.mxu0 0.0
  %724 = vmatmul.mubr.f32.gmra.mrb[0].mxu0 %v657
  %v725 = vpop.f32.mrb[0].mxu0
  %v726 = vadd.f32 %v133, %v725
  %v727 = vpop.f32.mrb[0].mxu0
  %728 = vdwg.mxu0
  %v730 = vrot.slane %v726, 6
  %v732 = vadd.f32 %v127, %v730
  %v733 = vxor.u32 %v732, 2147483648
  %v734 = vmul.f32 %v733, 1.442695
  %v735 = vpow.pop %v734
  %v736 = vadd.f32 %v735, 1.0
  %v737 = vrcp.pop %v736
  %v738 = vmul.f32 1.0, %v737
  %739 = vrot.lane.b32.xlu0 %v730, 64
  %v740 = vpop.permute.xlu0 %739
  %v742 = vmul.f32 %v738, %v740
  %744 = vrot.lane.b32.xlu0 %v742, 64
  %v745 = vpop.permute.xlu0 %744
  %v747 = vadd.f32 %v127, %v745
  %v748 = vtanh.pop %v747
  %v749 = vsub.f32 1.0, %v738
  %751 = vrot.lane.b32.xlu0 %v748, 96
  %v752 = vpop.permute.xlu0 %751
  %v754 = vmul.f32 %v749, %v752
  %v755 = vrot.slane %v653, 6
  %v757 = vmul.f32 %v738, %v755
  %v758 = vadd.f32 %v754, %v757
  %v760 = vrot.slane %v758, 2
  %761 = vrot.lane.b32.xlu0 %v760, 96
  %v762 = vpop.permute.xlu0 %761
  %v763 = vsel %vm134, %v762, 0
  %765 = vmatprep.subr.mxu0 0.0
  %766 = vmatpush1.msra.mxu0 %v35
  %767 = vmatprep.subr.mxu0 0.0
  %768 = vmatpush1.msra.mxu0 %v36
  %769 = vmatprep.subr.mxu0 0.0
  %770 = vmatpush1.msra.mxu0 %v37
  %771 = vmatprep.subr.mxu0 0.0
  %772 = vmatpush1.msra.mxu0 %v38
  %773 = vmatprep.subr.mxu0 0.0
  %774 = vmatpush1.msra.mxu0 0.0
  %775 = vmatprep.subr.mxu0 0.0
  %776 = vmatpush1.msra.mxu0 0.0
  %777 = vmatprep.subr.mxu0 0.0
  %778 = vmatpush1.msra.mxu0 0.0
  %779 = vmatprep.subr.mxu0 0.0
  %780 = vmatpush1.msra.mxu0 0.0
  %781 = vmatprep.subr.mxu0 0.0
  %782 = vmatpush1.msra.mxu0 0.0
  %783 = vmatprep.subr.mxu0 0.0
  %784 = vmatpush1.msra.mxu0 0.0
  %785 = vmatprep.subr.mxu0 0.0
  %786 = vmatpush1.msra.mxu0 0.0
  %787 = vmatprep.subr.mxu0 0.0
  %788 = vmatpush1.msra.mxu0 0.0
  %789 = vmatprep.subr.mxu0 0.0
  %790 = vmatpush1.msra.mxu0 0.0
  %791 = vmatprep.subr.mxu0 0.0
  %792 = vmatpush1.msra.mxu0 0.0
  %793 = vmatprep.subr.mxu0 0.0
  %794 = vmatpush1.msra.mxu0 0.0
  %795 = vmatprep.subr.mxu0 0.0
  %796 = vmatpush1.msra.mxu0 0.0
  %797 = vmatprep.subr.mxu0 0.0
  %798 = vmatpush1.msra.mxu0 0.0
  %799 = vmatprep.subr.mxu0 0.0
  %800 = vmatpush1.msra.mxu0 0.0
  %801 = vmatprep.subr.mxu0 0.0
  %802 = vmatpush1.msra.mxu0 0.0
  %803 = vmatprep.subr.mxu0 0.0
  %804 = vmatpush1.msra.mxu0 0.0
  %805 = vmatprep.subr.mxu0 0.0
  %806 = vmatpush1.msra.mxu0 0.0
  %807 = vmatprep.subr.mxu0 0.0
  %808 = vmatpush1.msra.mxu0 0.0
  %809 = vmatprep.subr.mxu0 0.0
  %810 = vmatpush1.msra.mxu0 0.0
  %811 = vmatprep.subr.mxu0 0.0
  %812 = vmatpush1.msra.mxu0 0.0
  %813 = vmatprep.subr.mxu0 0.0
  %814 = vmatpush1.msra.mxu0 0.0
  %815 = vmatprep.subr.mxu0 0.0
  %816 = vmatpush1.msra.mxu0 0.0
  %817 = vmatprep.subr.mxu0 0.0
  %818 = vmatpush1.msra.mxu0 0.0
  %819 = vmatprep.subr.mxu0 0.0
  %820 = vmatpush1.msra.mxu0 0.0
  %821 = vmatprep.subr.mxu0 0.0
  %822 = vmatpush1.msra.mxu0 0.0
  %823 = vmatprep.subr.mxu0 0.0
  %824 = vmatpush1.msra.mxu0 0.0
  %825 = vmatprep.subr.mxu0 0.0
  %826 = vmatpush1.msra.mxu0 0.0
  %827 = vmatprep.subr.mxu0 0.0
  %828 = vmatpush1.msra.mxu0 0.0
  %829 = vmatprep.mubr.f32.mxu0 0.0
  %830 = vmatmul.mubr.f32.gmra.mrb[0].mxu0 %v763
  %v831 = vpop.f32.mrb[0].mxu0
  %v832 = vadd.f32 %v133, %v831
  %v833 = vpop.f32.mrb[0].mxu0
  %834 = vdwg.mxu0
  %v836 = vrot.slane %v832, 4
  %v838 = vadd.f32 %v127, %v836
  %v839 = vxor.u32 %v838, 2147483648
  %v840 = vmul.f32 %v839, 1.442695
  %v841 = vpow.pop %v840
  %v842 = vadd.f32 %v841, 1.0
  %v843 = vrcp.pop %v842
  %v844 = vmul.f32 1.0, %v843
  %845 = vrot.lane.b32.xlu0 %v836, 64
  %v846 = vpop.permute.xlu0 %845
  %v848 = vmul.f32 %v844, %v846
  %850 = vrot.lane.b32.xlu0 %v848, 64
  %v851 = vpop.permute.xlu0 %850
  %v853 = vadd.f32 %v127, %v851
  %v854 = vtanh.pop %v853
  %v855 = vsub.f32 1.0, %v844
  %857 = vrot.lane.b32.xlu0 %v854, 96
  %v858 = vpop.permute.xlu0 %857
  %v860 = vmul.f32 %v855, %v858
  %v861 = vrot.slane %v758, 6
  %v863 = vmul.f32 %v844, %v861
  %v864 = vadd.f32 %v860, %v863
  %v866 = vrot.slane %v864, 4
  %867 = vrot.lane.b32.xlu0 %v866, 96
  %v868 = vpop.permute.xlu0 %867
  %v869 = vsel %vm134, %v868, 0
  %871 = vmatprep.subr.mxu0 0.0
  %872 = vmatpush1.msra.mxu0 %v35
  %873 = vmatprep.subr.mxu0 0.0
  %874 = vmatpush1.msra.mxu0 %v36
  %875 = vmatprep.subr.mxu0 0.0
  %876 = vmatpush1.msra.mxu0 %v37
  %877 = vmatprep.subr.mxu0 0.0
  %878 = vmatpush1.msra.mxu0 %v38
  %879 = vmatprep.subr.mxu0 0.0
  %880 = vmatpush1.msra.mxu0 0.0
  %881 = vmatprep.subr.mxu0 0.0
  %882 = vmatpush1.msra.mxu0 0.0
  %883 = vmatprep.subr.mxu0 0.0
  %884 = vmatpush1.msra.mxu0 0.0
  %885 = vmatprep.subr.mxu0 0.0
  %886 = vmatpush1.msra.mxu0 0.0
  %887 = vmatprep.subr.mxu0 0.0
  %888 = vmatpush1.msra.mxu0 0.0
  %889 = vmatprep.subr.mxu0 0.0
  %890 = vmatpush1.msra.mxu0 0.0
  %891 = vmatprep.subr.mxu0 0.0
  %892 = vmatpush1.msra.mxu0 0.0
  %893 = vmatprep.subr.mxu0 0.0
  %894 = vmatpush1.msra.mxu0 0.0
  %895 = vmatprep.subr.mxu0 0.0
  %896 = vmatpush1.msra.mxu0 0.0
  %897 = vmatprep.subr.mxu0 0.0
  %898 = vmatpush1.msra.mxu0 0.0
  %899 = vmatprep.subr.mxu0 0.0
  %900 = vmatpush1.msra.mxu0 0.0
  %901 = vmatprep.subr.mxu0 0.0
  %902 = vmatpush1.msra.mxu0 0.0
  %903 = vmatprep.subr.mxu0 0.0
  %904 = vmatpush1.msra.mxu0 0.0
  %905 = vmatprep.subr.mxu0 0.0
  %906 = vmatpush1.msra.mxu0 0.0
  %907 = vmatprep.subr.mxu0 0.0
  %908 = vmatpush1.msra.mxu0 0.0
  %909 = vmatprep.subr.mxu0 0.0
  %910 = vmatpush1.msra.mxu0 0.0
  %911 = vmatprep.subr.mxu0 0.0
  %912 = vmatpush1.msra.mxu0 0.0
  %913 = vmatprep.subr.mxu0 0.0
  %914 = vmatpush1.msra.mxu0 0.0
  %915 = vmatprep.subr.mxu0 0.0
  %916 = vmatpush1.msra.mxu0 0.0
  %917 = vmatprep.subr.mxu0 0.0
  %918 = vmatpush1.msra.mxu0 0.0
  %919 = vmatprep.subr.mxu0 0.0
  %920 = vmatpush1.msra.mxu0 0.0
  %921 = vmatprep.subr.mxu0 0.0
  %922 = vmatpush1.msra.mxu0 0.0
  %923 = vmatprep.subr.mxu0 0.0
  %924 = vmatpush1.msra.mxu0 0.0
  %925 = vmatprep.subr.mxu0 0.0
  %926 = vmatpush1.msra.mxu0 0.0
  %927 = vmatprep.subr.mxu0 0.0
  %928 = vmatpush1.msra.mxu0 0.0
  %929 = vmatprep.subr.mxu0 0.0
  %930 = vmatpush1.msra.mxu0 0.0
  %931 = vmatprep.subr.mxu0 0.0
  %932 = vmatpush1.msra.mxu0 0.0
  %933 = vmatprep.subr.mxu0 0.0
  %934 = vmatpush1.msra.mxu0 0.0
  %935 = vmatprep.mubr.f32.mxu0 0.0
  %936 = vmatmul.mubr.f32.gmra.mrb[0].mxu0 %v869
  %v937 = vpop.f32.mrb[0].mxu0
  %v938 = vadd.f32 %v133, %v937
  %v939 = vpop.f32.mrb[0].mxu0
  %940 = vdwg.mxu0
  %v942 = vrot.slane %v938, 2
  %v944 = vadd.f32 %v127, %v942
  %v945 = vxor.u32 %v944, 2147483648
  %v946 = vmul.f32 %v945, 1.442695
  %v947 = vpow.pop %v946
  %v948 = vadd.f32 %v947, 1.0
  %v949 = vrcp.pop %v948
  %v950 = vmul.f32 1.0, %v949
  %951 = vrot.lane.b32.xlu0 %v942, 64
  %v952 = vpop.permute.xlu0 %951
  %v954 = vmul.f32 %v950, %v952
  %956 = vrot.lane.b32.xlu0 %v954, 64
  %v957 = vpop.permute.xlu0 %956
  %v959 = vadd.f32 %v127, %v957
  %v960 = vtanh.pop %v959
  %v961 = vsub.f32 1.0, %v950
  %963 = vrot.lane.b32.xlu0 %v960, 96
  %v964 = vpop.permute.xlu0 %963
  %v966 = vmul.f32 %v961, %v964
  %v967 = vrot.slane %v864, 6
  %v969 = vmul.f32 %v950, %v967
  %v970 = vadd.f32 %v966, %v969
  %vm971 = vcmask 1041408
  %v972 = vsel %vm971, %v233, %v338
  %v973 = vsel %vm51, %v972, %v444
  %vm974 = vcmask 1045504
  %v975 = vsel %vm974, %v973, %v550
  %v976 = vsel %vm971, %v653, %v758
  %v977 = vsel %vm51, %v976, %v864
  %v978 = vsel %vm974, %v977, %v970
  %v979 = vld [vmem:[%s4] sm:$0xff]
  %v980 = vld [vmem:[%s4 + $0x8] sm:$0xff]
  %v981 = vld [vmem:[%s4 + $0x10] sm:$0xff]
  %v982 = vld [vmem:[%s4 + $0x18] sm:$0xff]
  %v983 = vld [vmem:[%s5] sm:$0xff]
  %v984 = vld [vmem:[%s5 + $0x8] sm:$0xff]
  %v985 = vld [vmem:[%s5 + $0x10] sm:$0xff]
  %v986 = vld [vmem:[%s5 + $0x18] sm:$0xff]
  %v987 = vld [vmem:[%s6] sm:$0x3]
  %v988 = vlaneseq
  %v989 = vshrl.u32 %v988, 7
  %v990 = vsub.s32 0, %v989
  %v991 = vrot.slane %v987, %v990
  %994 = vrot.lane.b32.xlu0 %v975, 96
  %v995 = vpop.permute.xlu0 %994
  %996 = vrot.lane.b32.xlu0 %v978, 96
  %v997 = vpop.permute.xlu0 %996
  %v998 = vsel %vm134, %v995, 0
  %v1000 = vsel %vm134, %v997, 0
  %1002 = vmatprep.subr.mxu0 0.0
  %1003 = vmatpush1.msra.mxu0 %v979
  %1004 = vmatprep.subr.mxu0 0.0
  %1005 = vmatpush1.msra.mxu0 %v980
  %1006 = vmatprep.subr.mxu0 0.0
  %1007 = vmatpush1.msra.mxu0 %v981
  %1008 = vmatprep.subr.mxu0 0.0
  %1009 = vmatpush1.msra.mxu0 %v982
  %1010 = vmatprep.subr.mxu0 0.0
  %1011 = vmatpush1.msra.mxu0 0.0
  %1012 = vmatprep.subr.mxu0 0.0
  %1013 = vmatpush1.msra.mxu0 0.0
  %1014 = vmatprep.subr.mxu0 0.0
  %1015 = vmatpush1.msra.mxu0 0.0
  %1016 = vmatprep.subr.mxu0 0.0
  %1017 = vmatpush1.msra.mxu0 0.0
  %1018 = vmatprep.subr.mxu0 0.0
  %1019 = vmatpush1.msra.mxu0 0.0
  %1020 = vmatprep.subr.mxu0 0.0
  %1021 = vmatpush1.msra.mxu0 0.0
  %1022 = vmatprep.subr.mxu0 0.0
  %1023 = vmatpush1.msra.mxu0 0.0
  %1024 = vmatprep.subr.mxu0 0.0
  %1025 = vmatpush1.msra.mxu0 0.0
  %1026 = vmatprep.subr.mxu0 0.0
  %1027 = vmatpush1.msra.mxu0 0.0
  %1028 = vmatprep.subr.mxu0 0.0
  %1029 = vmatpush1.msra.mxu0 0.0
  %1030 = vmatprep.subr.mxu0 0.0
  %1031 = vmatpush1.msra.mxu0 0.0
  %1032 = vmatprep.subr.mxu0 0.0
  %1033 = vmatpush1.msra.mxu0 0.0
  %1034 = vmatprep.subr.mxu0 0.0
  %1035 = vmatpush1.msra.mxu0 0.0
  %1036 = vmatprep.subr.mxu0 0.0
  %1037 = vmatpush1.msra.mxu0 0.0
  %1038 = vmatprep.subr.mxu0 0.0
  %1039 = vmatpush1.msra.mxu0 0.0
  %1040 = vmatprep.subr.mxu0 0.0
  %1041 = vmatpush1.msra.mxu0 0.0
  %1042 = vmatprep.subr.mxu0 0.0
  %1043 = vmatpush1.msra.mxu0 0.0
  %1044 = vmatprep.subr.mxu0 0.0
  %1045 = vmatpush1.msra.mxu0 0.0
  %1046 = vmatprep.subr.mxu0 0.0
  %1047 = vmatpush1.msra.mxu0 0.0
  %1048 = vmatprep.subr.mxu0 0.0
  %1049 = vmatpush1.msra.mxu0 0.0
  %1050 = vmatprep.subr.mxu0 0.0
  %1051 = vmatpush1.msra.mxu0 0.0
  %1052 = vmatprep.subr.mxu0 0.0
  %1053 = vmatpush1.msra.mxu0 0.0
  %1054 = vmatprep.subr.mxu0 0.0
  %1055 = vmatpush1.msra.mxu0 0.0
  %1056 = vmatprep.subr.mxu0 0.0
  %1057 = vmatpush1.msra.mxu0 0.0
  %1058 = vmatprep.subr.mxu0 0.0
  %1059 = vmatpush1.msra.mxu0 0.0
  %1060 = vmatprep.subr.mxu0 0.0
  %1061 = vmatpush1.msra.mxu0 0.0
  %1062 = vmatprep.subr.mxu0 0.0
  %1063 = vmatpush1.msra.mxu0 0.0
  %1064 = vmatprep.subr.mxu0 0.0
  %1065 = vmatpush1.msra.mxu0 0.0
  %1066 = vmatprep.mubr.f32.mxu0 0.0
  %1067 = vmatmul.mubr.f32.gmra.mrb[0].mxu0 %v998
  %v1068 = vpop.f32.mrb[0].mxu0
  %v1069 = vadd.f32 %v991, %v1068
  %v1070 = vpop.f32.mrb[0].mxu0
  %1071 = vmatprep.mubr.f32.mxu0 0.0
  %1072 = vmatmul.mubr.f32.gmra.mrb[0].mxu0 %v1000
  %v1073 = vpop.f32.mrb[0].mxu0
  %v1074 = vadd.f32 %v991, %v1073
  %v1075 = vpop.f32.mrb[0].mxu0
  %1076 = vdwg.mxu0
  %v1077 = vlaneseq
  %v1078 = vshrl.u32 %v1077, 7
  %v1079 = vsub.s32 1, %v1078
  %v1080 = vrot.slane %v987, %v1079
  %1081 = vmatprep.subr.mxu0 0.0
  %1082 = vmatpush1.msra.mxu0 %v983
  %1083 = vmatprep.subr.mxu0 0.0
  %1084 = vmatpush1.msra.mxu0 %v984
  %1085 = vmatprep.subr.mxu0 0.0
  %1086 = vmatpush1.msra.mxu0 %v985
  %1087 = vmatprep.subr.mxu0 0.0
  %1088 = vmatpush1.msra.mxu0 %v986
  %1089 = vmatprep.subr.mxu0 0.0
  %1090 = vmatpush1.msra.mxu0 0.0
  %1091 = vmatprep.subr.mxu0 0.0
  %1092 = vmatpush1.msra.mxu0 0.0
  %1093 = vmatprep.subr.mxu0 0.0
  %1094 = vmatpush1.msra.mxu0 0.0
  %1095 = vmatprep.subr.mxu0 0.0
  %1096 = vmatpush1.msra.mxu0 0.0
  %1097 = vmatprep.subr.mxu0 0.0
  %1098 = vmatpush1.msra.mxu0 0.0
  %1099 = vmatprep.subr.mxu0 0.0
  %1100 = vmatpush1.msra.mxu0 0.0
  %1101 = vmatprep.subr.mxu0 0.0
  %1102 = vmatpush1.msra.mxu0 0.0
  %1103 = vmatprep.subr.mxu0 0.0
  %1104 = vmatpush1.msra.mxu0 0.0
  %1105 = vmatprep.subr.mxu0 0.0
  %1106 = vmatpush1.msra.mxu0 0.0
  %1107 = vmatprep.subr.mxu0 0.0
  %1108 = vmatpush1.msra.mxu0 0.0
  %1109 = vmatprep.subr.mxu0 0.0
  %1110 = vmatpush1.msra.mxu0 0.0
  %1111 = vmatprep.subr.mxu0 0.0
  %1112 = vmatpush1.msra.mxu0 0.0
  %1113 = vmatprep.subr.mxu0 0.0
  %1114 = vmatpush1.msra.mxu0 0.0
  %1115 = vmatprep.subr.mxu0 0.0
  %1116 = vmatpush1.msra.mxu0 0.0
  %1117 = vmatprep.subr.mxu0 0.0
  %1118 = vmatpush1.msra.mxu0 0.0
  %1119 = vmatprep.subr.mxu0 0.0
  %1120 = vmatpush1.msra.mxu0 0.0
  %1121 = vmatprep.subr.mxu0 0.0
  %1122 = vmatpush1.msra.mxu0 0.0
  %1123 = vmatprep.subr.mxu0 0.0
  %1124 = vmatpush1.msra.mxu0 0.0
  %1125 = vmatprep.subr.mxu0 0.0
  %1126 = vmatpush1.msra.mxu0 0.0
  %1127 = vmatprep.subr.mxu0 0.0
  %1128 = vmatpush1.msra.mxu0 0.0
  %1129 = vmatprep.subr.mxu0 0.0
  %1130 = vmatpush1.msra.mxu0 0.0
  %1131 = vmatprep.subr.mxu0 0.0
  %1132 = vmatpush1.msra.mxu0 0.0
  %1133 = vmatprep.subr.mxu0 0.0
  %1134 = vmatpush1.msra.mxu0 0.0
  %1135 = vmatprep.subr.mxu0 0.0
  %1136 = vmatpush1.msra.mxu0 0.0
  %1137 = vmatprep.subr.mxu0 0.0
  %1138 = vmatpush1.msra.mxu0 0.0
  %1139 = vmatprep.subr.mxu0 0.0
  %1140 = vmatpush1.msra.mxu0 0.0
  %1141 = vmatprep.subr.mxu0 0.0
  %1142 = vmatpush1.msra.mxu0 0.0
  %1143 = vmatprep.subr.mxu0 0.0
  %1144 = vmatpush1.msra.mxu0 0.0
  %1145 = vmatprep.mubr.f32.mxu0 0.0
  %1146 = vmatmul.mubr.f32.gmra.mrb[0].mxu0 %v136
  %v1147 = vpop.f32.mrb[0].mxu0
  %v1148 = vadd.f32 %v1080, %v1147
  %v1149 = vpop.f32.mrb[0].mxu0
  %1150 = vdwg.mxu0
  %v1151 = vadd.f32 %v1069, %v1148
  %v1152 = vxor.u32 %v1151, 2147483648
  %v1153 = vmul.f32 %v1152, 1.442695
  %v1154 = vpow.pop %v1153
  %v1155 = vadd.f32 %v1154, 1.0
  %v1156 = vrcp.pop %v1155
  %v1157 = vmul.f32 1.0, %v1156
  %1159 = vrot.lane.b32.xlu0 %v1148, 64
  %v1160 = vpop.permute.xlu0 %1159
  %v1162 = vmul.f32 %v1157, %v1160
  %1164 = vrot.lane.b32.xlu0 %v1162, 64
  %v1165 = vpop.permute.xlu0 %1164
  %v1167 = vadd.f32 %v1069, %v1165
  %v1168 = vtanh.pop %v1167
  %v1169 = vsub.f32 1.0, %v1157
  %1171 = vrot.lane.b32.xlu0 %v1168, 96
  %v1172 = vpop.permute.xlu0 %1171
  %v1174 = vmul.f32 %v1169, %v1172
  %v1175 = vmul.f32 %v1157, 0.0
  %v1176 = vadd.f32 %v1174, %v1175
  %1178 = vrot.lane.b32.xlu0 %v1176, 96
  %v1179 = vpop.permute.xlu0 %1178
  %v1180 = vsel %vm134, %v1179, 0
  %1182 = vmatprep.subr.mxu0 0.0
  %1183 = vmatpush1.msra.mxu0 %v983
  %1184 = vmatprep.subr.mxu0 0.0
  %1185 = vmatpush1.msra.mxu0 %v984
  %1186 = vmatprep.subr.mxu0 0.0
  %1187 = vmatpush1.msra.mxu0 %v985
  %1188 = vmatprep.subr.mxu0 0.0
  %1189 = vmatpush1.msra.mxu0 %v986
  %1190 = vmatprep.subr.mxu0 0.0
  %1191 = vmatpush1.msra.mxu0 0.0
  %1192 = vmatprep.subr.mxu0 0.0
  %1193 = vmatpush1.msra.mxu0 0.0
  %1194 = vmatprep.subr.mxu0 0.0
  %1195 = vmatpush1.msra.mxu0 0.0
  %1196 = vmatprep.subr.mxu0 0.0
  %1197 = vmatpush1.msra.mxu0 0.0
  %1198 = vmatprep.subr.mxu0 0.0
  %1199 = vmatpush1.msra.mxu0 0.0
  %1200 = vmatprep.subr.mxu0 0.0
  %1201 = vmatpush1.msra.mxu0 0.0
  %1202 = vmatprep.subr.mxu0 0.0
  %1203 = vmatpush1.msra.mxu0 0.0
  %1204 = vmatprep.subr.mxu0 0.0
  %1205 = vmatpush1.msra.mxu0 0.0
  %1206 = vmatprep.subr.mxu0 0.0
  %1207 = vmatpush1.msra.mxu0 0.0
  %1208 = vmatprep.subr.mxu0 0.0
  %1209 = vmatpush1.msra.mxu0 0.0
  %1210 = vmatprep.subr.mxu0 0.0
  %1211 = vmatpush1.msra.mxu0 0.0
  %1212 = vmatprep.subr.mxu0 0.0
  %1213 = vmatpush1.msra.mxu0 0.0
  %1214 = vmatprep.subr.mxu0 0.0
  %1215 = vmatpush1.msra.mxu0 0.0
  %1216 = vmatprep.subr.mxu0 0.0
  %1217 = vmatpush1.msra.mxu0 0.0
  %1218 = vmatprep.subr.mxu0 0.0
  %1219 = vmatpush1.msra.mxu0 0.0
  %1220 = vmatprep.subr.mxu0 0.0
  %1221 = vmatpush1.msra.mxu0 0.0
  %1222 = vmatprep.subr.mxu0 0.0
  %1223 = vmatpush1.msra.mxu0 0.0
  %1224 = vmatprep.subr.mxu0 0.0
  %1225 = vmatpush1.msra.mxu0 0.0
  %1226 = vmatprep.subr.mxu0 0.0
  %1227 = vmatpush1.msra.mxu0 0.0
  %1228 = vmatprep.subr.mxu0 0.0
  %1229 = vmatpush1.msra.mxu0 0.0
  %1230 = vmatprep.subr.mxu0 0.0
  %1231 = vmatpush1.msra.mxu0 0.0
  %1232 = vmatprep.subr.mxu0 0.0
  %1233 = vmatpush1.msra.mxu0 0.0
  %1234 = vmatprep.subr.mxu0 0.0
  %1235 = vmatpush1.msra.mxu0 0.0
  %1236 = vmatprep.subr.mxu0 0.0
  %1237 = vmatpush1.msra.mxu0 0.0
  %1238 = vmatprep.subr.mxu0 0.0
  %1239 = vmatpush1.msra.mxu0 0.0
  %1240 = vmatprep.subr.mxu0 0.0
  %1241 = vmatpush1.msra.mxu0 0.0
  %1242 = vmatprep.subr.mxu0 0.0
  %1243 = vmatpush1.msra.mxu0 0.0
  %1244 = vmatprep.subr.mxu0 0.0
  %1245 = vmatpush1.msra.mxu0 0.0
  %1246 = vmatprep.mubr.f32.mxu0 0.0
  %1247 = vmatmul.mubr.f32.gmra.mrb[0].mxu0 %v1180
  %v1248 = vpop.f32.mrb[0].mxu0
  %v1249 = vadd.f32 %v1080, %v1248
  %v1250 = vpop.f32.mrb[0].mxu0
  %1251 = vdwg.mxu0
  %v1253 = vrot.slane %v1249, 6
  %v1255 = vadd.f32 %v1069, %v1253
  %v1256 = vxor.u32 %v1255, 2147483648
  %v1257 = vmul.f32 %v1256, 1.442695
  %v1258 = vpow.pop %v1257
  %v1259 = vadd.f32 %v1258, 1.0
  %v1260 = vrcp.pop %v1259
  %v1261 = vmul.f32 1.0, %v1260
  %1262 = vrot.lane.b32.xlu0 %v1253, 64
  %v1263 = vpop.permute.xlu0 %1262
  %v1265 = vmul.f32 %v1261, %v1263
  %1267 = vrot.lane.b32.xlu0 %v1265, 64
  %v1268 = vpop.permute.xlu0 %1267
  %v1270 = vadd.f32 %v1069, %v1268
  %v1271 = vtanh.pop %v1270
  %v1272 = vsub.f32 1.0, %v1261
  %1274 = vrot.lane.b32.xlu0 %v1271, 96
  %v1275 = vpop.permute.xlu0 %1274
  %v1277 = vmul.f32 %v1272, %v1275
  %v1278 = vrot.slane %v1176, 6
  %v1280 = vmul.f32 %v1261, %v1278
  %v1281 = vadd.f32 %v1277, %v1280
  %v1283 = vrot.slane %v1281, 2
  %1284 = vrot.lane.b32.xlu0 %v1283, 96
  %v1285 = vpop.permute.xlu0 %1284
  %v1286 = vsel %vm134, %v1285, 0
  %1288 = vmatprep.subr.mxu0 0.0
  %1289 = vmatpush1.msra.mxu0 %v983
  %1290 = vmatprep.subr.mxu0 0.0
  %1291 = vmatpush1.msra.mxu0 %v984
  %1292 = vmatprep.subr.mxu0 0.0
  %1293 = vmatpush1.msra.mxu0 %v985
  %1294 = vmatprep.subr.mxu0 0.0
  %1295 = vmatpush1.msra.mxu0 %v986
  %1296 = vmatprep.subr.mxu0 0.0
  %1297 = vmatpush1.msra.mxu0 0.0
  %1298 = vmatprep.subr.mxu0 0.0
  %1299 = vmatpush1.msra.mxu0 0.0
  %1300 = vmatprep.subr.mxu0 0.0
  %1301 = vmatpush1.msra.mxu0 0.0
  %1302 = vmatprep.subr.mxu0 0.0
  %1303 = vmatpush1.msra.mxu0 0.0
  %1304 = vmatprep.subr.mxu0 0.0
  %1305 = vmatpush1.msra.mxu0 0.0
  %1306 = vmatprep.subr.mxu0 0.0
  %1307 = vmatpush1.msra.mxu0 0.0
  %1308 = vmatprep.subr.mxu0 0.0
  %1309 = vmatpush1.msra.mxu0 0.0
  %1310 = vmatprep.subr.mxu0 0.0
  %1311 = vmatpush1.msra.mxu0 0.0
  %1312 = vmatprep.subr.mxu0 0.0
  %1313 = vmatpush1.msra.mxu0 0.0
  %1314 = vmatprep.subr.mxu0 0.0
  %1315 = vmatpush1.msra.mxu0 0.0
  %1316 = vmatprep.subr.mxu0 0.0
  %1317 = vmatpush1.msra.mxu0 0.0
  %1318 = vmatprep.subr.mxu0 0.0
  %1319 = vmatpush1.msra.mxu0 0.0
  %1320 = vmatprep.subr.mxu0 0.0
  %1321 = vmatpush1.msra.mxu0 0.0
  %1322 = vmatprep.subr.mxu0 0.0
  %1323 = vmatpush1.msra.mxu0 0.0
  %1324 = vmatprep.subr.mxu0 0.0
  %1325 = vmatpush1.msra.mxu0 0.0
  %1326 = vmatprep.subr.mxu0 0.0
  %1327 = vmatpush1.msra.mxu0 0.0
  %1328 = vmatprep.subr.mxu0 0.0
  %1329 = vmatpush1.msra.mxu0 0.0
  %1330 = vmatprep.subr.mxu0 0.0
  %1331 = vmatpush1.msra.mxu0 0.0
  %1332 = vmatprep.subr.mxu0 0.0
  %1333 = vmatpush1.msra.mxu0 0.0
  %1334 = vmatprep.subr.mxu0 0.0
  %1335 = vmatpush1.msra.mxu0 0.0
  %1336 = vmatprep.subr.mxu0 0.0
  %1337 = vmatpush1.msra.mxu0 0.0
  %1338 = vmatprep.subr.mxu0 0.0
  %1339 = vmatpush1.msra.mxu0 0.0
  %1340 = vmatprep.subr.mxu0 0.0
  %1341 = vmatpush1.msra.mxu0 0.0
  %1342 = vmatprep.subr.mxu0 0.0
  %1343 = vmatpush1.msra.mxu0 0.0
  %1344 = vmatprep.subr.mxu0 0.0
  %1345 = vmatpush1.msra.mxu0 0.0
  %1346 = vmatprep.subr.mxu0 0.0
  %1347 = vmatpush1.msra.mxu0 0.0
  %1348 = vmatprep.subr.mxu0 0.0
  %1349 = vmatpush1.msra.mxu0 0.0
  %1350 = vmatprep.subr.mxu0 0.0
  %1351 = vmatpush1.msra.mxu0 0.0
  %1352 = vmatprep.mubr.f32.mxu0 0.0
  %1353 = vmatmul.mubr.f32.gmra.mrb[0].mxu0 %v1286
  %v1354 = vpop.f32.mrb[0].mxu0
  %v1355 = vadd.f32 %v1080, %v1354
  %v1356 = vpop.f32.mrb[0].mxu0
  %1357 = vdwg.mxu0
  %v1359 = vrot.slane %v1355, 4
  %v1361 = vadd.f32 %v1069, %v1359
  %v1362 = vxor.u32 %v1361, 2147483648
  %v1363 = vmul.f32 %v1362, 1.442695
  %v1364 = vpow.pop %v1363
  %v1365 = vadd.f32 %v1364, 1.0
  %v1366 = vrcp.pop %v1365
  %v1367 = vmul.f32 1.0, %v1366
  %1368 = vrot.lane.b32.xlu0 %v1359, 64
  %v1369 = vpop.permute.xlu0 %1368
  %v1371 = vmul.f32 %v1367, %v1369
  %1373 = vrot.lane.b32.xlu0 %v1371, 64
  %v1374 = vpop.permute.xlu0 %1373
  %v1376 = vadd.f32 %v1069, %v1374
  %v1377 = vtanh.pop %v1376
  %v1378 = vsub.f32 1.0, %v1367
  %1380 = vrot.lane.b32.xlu0 %v1377, 96
  %v1381 = vpop.permute.xlu0 %1380
  %v1383 = vmul.f32 %v1378, %v1381
  %v1384 = vrot.slane %v1281, 6
  %v1386 = vmul.f32 %v1367, %v1384
  %v1387 = vadd.f32 %v1383, %v1386
  %v1389 = vrot.slane %v1387, 4
  %1390 = vrot.lane.b32.xlu0 %v1389, 96
  %v1391 = vpop.permute.xlu0 %1390
  %v1392 = vsel %vm134, %v1391, 0
  %1394 = vmatprep.subr.mxu0 0.0
  %1395 = vmatpush1.msra.mxu0 %v983
  %1396 = vmatprep.subr.mxu0 0.0
  %1397 = vmatpush1.msra.mxu0 %v984
  %1398 = vmatprep.subr.mxu0 0.0
  %1399 = vmatpush1.msra.mxu0 %v985
  %1400 = vmatprep.subr.mxu0 0.0
  %1401 = vmatpush1.msra.mxu0 %v986
  %1402 = vmatprep.subr.mxu0 0.0
  %1403 = vmatpush1.msra.mxu0 0.0
  %1404 = vmatprep.subr.mxu0 0.0
  %1405 = vmatpush1.msra.mxu0 0.0
  %1406 = vmatprep.subr.mxu0 0.0
  %1407 = vmatpush1.msra.mxu0 0.0
  %1408 = vmatprep.subr.mxu0 0.0
  %1409 = vmatpush1.msra.mxu0 0.0
  %1410 = vmatprep.subr.mxu0 0.0
  %1411 = vmatpush1.msra.mxu0 0.0
  %1412 = vmatprep.subr.mxu0 0.0
  %1413 = vmatpush1.msra.mxu0 0.0
  %1414 = vmatprep.subr.mxu0 0.0
  %1415 = vmatpush1.msra.mxu0 0.0
  %1416 = vmatprep.subr.mxu0 0.0
  %1417 = vmatpush1.msra.mxu0 0.0
  %1418 = vmatprep.subr.mxu0 0.0
  %1419 = vmatpush1.msra.mxu0 0.0
  %1420 = vmatprep.subr.mxu0 0.0
  %1421 = vmatpush1.msra.mxu0 0.0
  %1422 = vmatprep.subr.mxu0 0.0
  %1423 = vmatpush1.msra.mxu0 0.0
  %1424 = vmatprep.subr.mxu0 0.0
  %1425 = vmatpush1.msra.mxu0 0.0
  %1426 = vmatprep.subr.mxu0 0.0
  %1427 = vmatpush1.msra.mxu0 0.0
  %1428 = vmatprep.subr.mxu0 0.0
  %1429 = vmatpush1.msra.mxu0 0.0
  %1430 = vmatprep.subr.mxu0 0.0
  %1431 = vmatpush1.msra.mxu0 0.0
  %1432 = vmatprep.subr.mxu0 0.0
  %1433 = vmatpush1.msra.mxu0 0.0
  %1434 = vmatprep.subr.mxu0 0.0
  %1435 = vmatpush1.msra.mxu0 0.0
  %1436 = vmatprep.subr.mxu0 0.0
  %1437 = vmatpush1.msra.mxu0 0.0
  %1438 = vmatprep.subr.mxu0 0.0
  %1439 = vmatpush1.msra.mxu0 0.0
  %1440 = vmatprep.subr.mxu0 0.0
  %1441 = vmatpush1.msra.mxu0 0.0
  %1442 = vmatprep.subr.mxu0 0.0
  %1443 = vmatpush1.msra.mxu0 0.0
  %1444 = vmatprep.subr.mxu0 0.0
  %1445 = vmatpush1.msra.mxu0 0.0
  %1446 = vmatprep.subr.mxu0 0.0
  %1447 = vmatpush1.msra.mxu0 0.0
  %1448 = vmatprep.subr.mxu0 0.0
  %1449 = vmatpush1.msra.mxu0 0.0
  %1450 = vmatprep.subr.mxu0 0.0
  %1451 = vmatpush1.msra.mxu0 0.0
  %1452 = vmatprep.subr.mxu0 0.0
  %1453 = vmatpush1.msra.mxu0 0.0
  %1454 = vmatprep.subr.mxu0 0.0
  %1455 = vmatpush1.msra.mxu0 0.0
  %1456 = vmatprep.subr.mxu0 0.0
  %1457 = vmatpush1.msra.mxu0 0.0
  %1458 = vmatprep.mubr.f32.mxu0 0.0
  %1459 = vmatmul.mubr.f32.gmra.mrb[0].mxu0 %v1392
  %v1460 = vpop.f32.mrb[0].mxu0
  %v1461 = vadd.f32 %v1080, %v1460
  %v1462 = vpop.f32.mrb[0].mxu0
  %1463 = vdwg.mxu0
  %v1465 = vrot.slane %v1461, 2
  %v1467 = vadd.f32 %v1069, %v1465
  %v1468 = vxor.u32 %v1467, 2147483648
  %v1469 = vmul.f32 %v1468, 1.442695
  %v1470 = vpow.pop %v1469
  %v1471 = vadd.f32 %v1470, 1.0
  %v1472 = vrcp.pop %v1471
  %v1473 = vmul.f32 1.0, %v1472
  %1474 = vrot.lane.b32.xlu0 %v1465, 64
  %v1475 = vpop.permute.xlu0 %1474
  %v1477 = vmul.f32 %v1473, %v1475
  %1479 = vrot.lane.b32.xlu0 %v1477, 64
  %v1480 = vpop.permute.xlu0 %1479
  %v1482 = vadd.f32 %v1069, %v1480
  %v1483 = vtanh.pop %v1482
  %v1484 = vsub.f32 1.0, %v1473
  %1486 = vrot.lane.b32.xlu0 %v1483, 96
  %v1487 = vpop.permute.xlu0 %1486
  %v1489 = vmul.f32 %v1484, %v1487
  %v1490 = vrot.slane %v1387, 6
  %v1492 = vmul.f32 %v1473, %v1490
  %v1493 = vadd.f32 %v1489, %v1492
  %v1495 = vrot.slane %v1493, 6
  %1496 = vrot.lane.b32.xlu0 %v1495, 96
  %v1497 = vpop.permute.xlu0 %1496
  %v1498 = vsel %vm134, %v1497, 0
  %1500 = vmatprep.subr.mxu0 0.0
  %1501 = vmatpush1.msra.mxu0 %v983
  %1502 = vmatprep.subr.mxu0 0.0
  %1503 = vmatpush1.msra.mxu0 %v984
  %1504 = vmatprep.subr.mxu0 0.0
  %1505 = vmatpush1.msra.mxu0 %v985
  %1506 = vmatprep.subr.mxu0 0.0
  %1507 = vmatpush1.msra.mxu0 %v986
  %1508 = vmatprep.subr.mxu0 0.0
  %1509 = vmatpush1.msra.mxu0 0.0
  %1510 = vmatprep.subr.mxu0 0.0
  %1511 = vmatpush1.msra.mxu0 0.0
  %1512 = vmatprep.subr.mxu0 0.0
  %1513 = vmatpush1.msra.mxu0 0.0
  %1514 = vmatprep.subr.mxu0 0.0
  %1515 = vmatpush1.msra.mxu0 0.0
  %1516 = vmatprep.subr.mxu0 0.0
  %1517 = vmatpush1.msra.mxu0 0.0
  %1518 = vmatprep.subr.mxu0 0.0
  %1519 = vmatpush1.msra.mxu0 0.0
  %1520 = vmatprep.subr.mxu0 0.0
  %1521 = vmatpush1.msra.mxu0 0.0
  %1522 = vmatprep.subr.mxu0 0.0
  %1523 = vmatpush1.msra.mxu0 0.0
  %1524 = vmatprep.subr.mxu0 0.0
  %1525 = vmatpush1.msra.mxu0 0.0
  %1526 = vmatprep.subr.mxu0 0.0
  %1527 = vmatpush1.msra.mxu0 0.0
  %1528 = vmatprep.subr.mxu0 0.0
  %1529 = vmatpush1.msra.mxu0 0.0
  %1530 = vmatprep.subr.mxu0 0.0
  %1531 = vmatpush1.msra.mxu0 0.0
  %1532 = vmatprep.subr.mxu0 0.0
  %1533 = vmatpush1.msra.mxu0 0.0
  %1534 = vmatprep.subr.mxu0 0.0
  %1535 = vmatpush1.msra.mxu0 0.0
  %1536 = vmatprep.subr.mxu0 0.0
  %1537 = vmatpush1.msra.mxu0 0.0
  %1538 = vmatprep.subr.mxu0 0.0
  %1539 = vmatpush1.msra.mxu0 0.0
  %1540 = vmatprep.subr.mxu0 0.0
  %1541 = vmatpush1.msra.mxu0 0.0
  %1542 = vmatprep.subr.mxu0 0.0
  %1543 = vmatpush1.msra.mxu0 0.0
  %1544 = vmatprep.subr.mxu0 0.0
  %1545 = vmatpush1.msra.mxu0 0.0
  %1546 = vmatprep.subr.mxu0 0.0
  %1547 = vmatpush1.msra.mxu0 0.0
  %1548 = vmatprep.subr.mxu0 0.0
  %1549 = vmatpush1.msra.mxu0 0.0
  %1550 = vmatprep.subr.mxu0 0.0
  %1551 = vmatpush1.msra.mxu0 0.0
  %1552 = vmatprep.subr.mxu0 0.0
  %1553 = vmatpush1.msra.mxu0 0.0
  %1554 = vmatprep.subr.mxu0 0.0
  %1555 = vmatpush1.msra.mxu0 0.0
  %1556 = vmatprep.subr.mxu0 0.0
  %1557 = vmatpush1.msra.mxu0 0.0
  %1558 = vmatprep.subr.mxu0 0.0
  %1559 = vmatpush1.msra.mxu0 0.0
  %1560 = vmatprep.subr.mxu0 0.0
  %1561 = vmatpush1.msra.mxu0 0.0
  %1562 = vmatprep.subr.mxu0 0.0
  %1563 = vmatpush1.msra.mxu0 0.0
  %1564 = vmatprep.mubr.f32.mxu0 0.0
  %1565 = vmatmul.mubr.f32.gmra.mrb[0].mxu0 %v1498
  %v1566 = vpop.f32.mrb[0].mxu0
  %v1567 = vadd.f32 %v1080, %v1566
  %v1568 = vpop.f32.mrb[0].mxu0
  %1569 = vdwg.mxu0
  %v1570 = vadd.f32 %v1074, %v1567
  %v1571 = vxor.u32 %v1570, 2147483648
  %v1572 = vmul.f32 %v1571, 1.442695
  %v1573 = vpow.pop %v1572
  %v1574 = vadd.f32 %v1573, 1.0
  %v1575 = vrcp.pop %v1574
  %v1576 = vmul.f32 1.0, %v1575
  %1578 = vrot.lane.b32.xlu0 %v1567, 64
  %v1579 = vpop.permute.xlu0 %1578
  %v1581 = vmul.f32 %v1576, %v1579
  %1583 = vrot.lane.b32.xlu0 %v1581, 64
  %v1584 = vpop.permute.xlu0 %1583
  %v1586 = vadd.f32 %v1074, %v1584
  %v1587 = vtanh.pop %v1586
  %v1588 = vsub.f32 1.0, %v1576
  %1590 = vrot.lane.b32.xlu0 %v1587, 96
  %v1591 = vpop.permute.xlu0 %1590
  %v1593 = vmul.f32 %v1588, %v1591
  %v1595 = vmul.f32 %v1576, %v1495
  %v1596 = vadd.f32 %v1593, %v1595
  %1598 = vrot.lane.b32.xlu0 %v1596, 96
  %v1599 = vpop.permute.xlu0 %1598
  %v1600 = vsel %vm134, %v1599, 0
  %1602 = vmatprep.subr.mxu0 0.0
  %1603 = vmatpush1.msra.mxu0 %v983
  %1604 = vmatprep.subr.mxu0 0.0
  %1605 = vmatpush1.msra.mxu0 %v984
  %1606 = vmatprep.subr.mxu0 0.0
  %1607 = vmatpush1.msra.mxu0 %v985
  %1608 = vmatprep.subr.mxu0 0.0
  %1609 = vmatpush1.msra.mxu0 %v986
  %1610 = vmatprep.subr.mxu0 0.0
  %1611 = vmatpush1.msra.mxu0 0.0
  %1612 = vmatprep.subr.mxu0 0.0
  %1613 = vmatpush1.msra.mxu0 0.0
  %1614 = vmatprep.subr.mxu0 0.0
  %1615 = vmatpush1.msra.mxu0 0.0
  %1616 = vmatprep.subr.mxu0 0.0
  %1617 = vmatpush1.msra.mxu0 0.0
  %1618 = vmatprep.subr.mxu0 0.0
  %1619 = vmatpush1.msra.mxu0 0.0
  %1620 = vmatprep.subr.mxu0 0.0
  %1621 = vmatpush1.msra.mxu0 0.0
  %1622 = vmatprep.subr.mxu0 0.0
  %1623 = vmatpush1.msra.mxu0 0.0
  %1624 = vmatprep.subr.mxu0 0.0
  %1625 = vmatpush1.msra.mxu0 0.0
  %1626 = vmatprep.subr.mxu0 0.0
  %1627 = vmatpush1.msra.mxu0 0.0
  %1628 = vmatprep.subr.mxu0 0.0
  %1629 = vmatpush1.msra.mxu0 0.0
  %1630 = vmatprep.subr.mxu0 0.0
  %1631 = vmatpush1.msra.mxu0 0.0
  %1632 = vmatprep.subr.mxu0 0.0
  %1633 = vmatpush1.msra.mxu0 0.0
  %1634 = vmatprep.subr.mxu0 0.0
  %1635 = vmatpush1.msra.mxu0 0.0
  %1636 = vmatprep.subr.mxu0 0.0
  %1637 = vmatpush1.msra.mxu0 0.0
  %1638 = vmatprep.subr.mxu0 0.0
  %1639 = vmatpush1.msra.mxu0 0.0
  %1640 = vmatprep.subr.mxu0 0.0
  %1641 = vmatpush1.msra.mxu0 0.0
  %1642 = vmatprep.subr.mxu0 0.0
  %1643 = vmatpush1.msra.mxu0 0.0
  %1644 = vmatprep.subr.mxu0 0.0
  %1645 = vmatpush1.msra.mxu0 0.0
  %1646 = vmatprep.subr.mxu0 0.0
  %1647 = vmatpush1.msra.mxu0 0.0
  %1648 = vmatprep.subr.mxu0 0.0
  %1649 = vmatpush1.msra.mxu0 0.0
  %1650 = vmatprep.subr.mxu0 0.0
  %1651 = vmatpush1.msra.mxu0 0.0
  %1652 = vmatprep.subr.mxu0 0.0
  %1653 = vmatpush1.msra.mxu0 0.0
  %1654 = vmatprep.subr.mxu0 0.0
  %1655 = vmatpush1.msra.mxu0 0.0
  %1656 = vmatprep.subr.mxu0 0.0
  %1657 = vmatpush1.msra.mxu0 0.0
  %1658 = vmatprep.subr.mxu0 0.0
  %1659 = vmatpush1.msra.mxu0 0.0
  %1660 = vmatprep.subr.mxu0 0.0
  %1661 = vmatpush1.msra.mxu0 0.0
  %1662 = vmatprep.subr.mxu0 0.0
  %1663 = vmatpush1.msra.mxu0 0.0
  %1664 = vmatprep.subr.mxu0 0.0
  %1665 = vmatpush1.msra.mxu0 0.0
  %1666 = vmatprep.mubr.f32.mxu0 0.0
  %1667 = vmatmul.mubr.f32.gmra.mrb[0].mxu0 %v1600
  %v1668 = vpop.f32.mrb[0].mxu0
  %v1669 = vadd.f32 %v1080, %v1668
  %v1670 = vpop.f32.mrb[0].mxu0
  %1671 = vdwg.mxu0
  %v1673 = vrot.slane %v1669, 6
  %v1675 = vadd.f32 %v1074, %v1673
  %v1676 = vxor.u32 %v1675, 2147483648
  %v1677 = vmul.f32 %v1676, 1.442695
  %v1678 = vpow.pop %v1677
  %v1679 = vadd.f32 %v1678, 1.0
  %v1680 = vrcp.pop %v1679
  %v1681 = vmul.f32 1.0, %v1680
  %1682 = vrot.lane.b32.xlu0 %v1673, 64
  %v1683 = vpop.permute.xlu0 %1682
  %v1685 = vmul.f32 %v1681, %v1683
  %1687 = vrot.lane.b32.xlu0 %v1685, 64
  %v1688 = vpop.permute.xlu0 %1687
  %v1690 = vadd.f32 %v1074, %v1688
  %v1691 = vtanh.pop %v1690
  %v1692 = vsub.f32 1.0, %v1681
  %1694 = vrot.lane.b32.xlu0 %v1691, 96
  %v1695 = vpop.permute.xlu0 %1694
  %v1697 = vmul.f32 %v1692, %v1695
  %v1698 = vrot.slane %v1596, 6
  %v1700 = vmul.f32 %v1681, %v1698
  %v1701 = vadd.f32 %v1697, %v1700
  %v1703 = vrot.slane %v1701, 2
  %1704 = vrot.lane.b32.xlu0 %v1703, 96
  %v1705 = vpop.permute.xlu0 %1704
  %v1706 = vsel %vm134, %v1705, 0
  %1708 = vmatprep.subr.mxu0 0.0
  %1709 = vmatpush1.msra.mxu0 %v983
  %1710 = vmatprep.subr.mxu0 0.0
  %1711 = vmatpush1.msra.mxu0 %v984
  %1712 = vmatprep.subr.mxu0 0.0
  %1713 = vmatpush1.msra.mxu0 %v985
  %1714 = vmatprep.subr.mxu0 0.0
  %1715 = vmatpush1.msra.mxu0 %v986
  %1716 = vmatprep.subr.mxu0 0.0
  %1717 = vmatpush1.msra.mxu0 0.0
  %1718 = vmatprep.subr.mxu0 0.0
  %1719 = vmatpush1.msra.mxu0 0.0
  %1720 = vmatprep.subr.mxu0 0.0
  %1721 = vmatpush1.msra.mxu0 0.0
  %1722 = vmatprep.subr.mxu0 0.0
  %1723 = vmatpush1.msra.mxu0 0.0
  %1724 = vmatprep.subr.mxu0 0.0
  %1725 = vmatpush1.msra.mxu0 0.0
  %1726 = vmatprep.subr.mxu0 0.0
  %1727 = vmatpush1.msra.mxu0 0.0
  %1728 = vmatprep.subr.mxu0 0.0
  %1729 = vmatpush1.msra.mxu0 0.0
  %1730 = vmatprep.subr.mxu0 0.0
  %1731 = vmatpush1.msra.mxu0 0.0
  %1732 = vmatprep.subr.mxu0 0.0
  %1733 = vmatpush1.msra.mxu0 0.0
  %1734 = vmatprep.subr.mxu0 0.0
  %1735 = vmatpush1.msra.mxu0 0.0
  %1736 = vmatprep.subr.mxu0 0.0
  %1737 = vmatpush1.msra.mxu0 0.0
  %1738 = vmatprep.subr.mxu0 0.0
  %1739 = vmatpush1.msra.mxu0 0.0
  %1740 = vmatprep.subr.mxu0 0.0
  %1741 = vmatpush1.msra.mxu0 0.0
  %1742 = vmatprep.subr.mxu0 0.0
  %1743 = vmatpush1.msra.mxu0 0.0
  %1744 = vmatprep.subr.mxu0 0.0
  %1745 = vmatpush1.msra.mxu0 0.0
  %1746 = vmatprep.subr.mxu0 0.0
  %1747 = vmatpush1.msra.mxu0 0.0
  %1748 = vmatprep.subr.mxu0 0.0
  %1749 = vmatpush1.msra.mxu0 0.0
  %1750 = vmatprep.subr.mxu0 0.0
  %1751 = vmatpush1.msra.mxu0 0.0
  %1752 = vmatprep.subr.mxu0 0.0
  %1753 = vmatpush1.msra.mxu0 0.0
  %1754 = vmatprep.subr.mxu0 0.0
  %1755 = vmatpush1.msra.mxu0 0.0
  %1756 = vmatprep.subr.mxu0 0.0
  %1757 = vmatpush1.msra.mxu0 0.0
  %1758 = vmatprep.subr.mxu0 0.0
  %1759 = vmatpush1.msra.mxu0 0.0
  %1760 = vmatprep.subr.mxu0 0.0
  %1761 = vmatpush1.msra.mxu0 0.0
  %1762 = vmatprep.subr.mxu0 0.0
  %1763 = vmatpush1.msra.mxu0 0.0
  %1764 = vmatprep.subr.mxu0 0.0
  %1765 = vmatpush1.msra.mxu0 0.0
  %1766 = vmatprep.subr.mxu0 0.0
  %1767 = vmatpush1.msra.mxu0 0.0
  %1768 = vmatprep.subr.mxu0 0.0
  %1769 = vmatpush1.msra.mxu0 0.0
  %1770 = vmatprep.subr.mxu0 0.0
  %1771 = vmatpush1.msra.mxu0 0.0
  %1772 = vmatprep.mubr.f32.mxu0 0.0
  %1773 = vmatmul.mubr.f32.gmra.mrb[0].mxu0 %v1706
  %v1774 = vpop.f32.mrb[0].mxu0
  %v1775 = vadd.f32 %v1080, %v1774
  %v1776 = vpop.f32.mrb[0].mxu0
  %1777 = vdwg.mxu0
  %v1779 = vrot.slane %v1775, 4
  %v1781 = vadd.f32 %v1074, %v1779
  %v1782 = vxor.u32 %v1781, 2147483648
  %v1783 = vmul.f32 %v1782, 1.442695
  %v1784 = vpow.pop %v1783
  %v1785 = vadd.f32 %v1784, 1.0
  %v1786 = vrcp.pop %v1785
  %v1787 = vmul.f32 1.0, %v1786
  %1788 = vrot.lane.b32.xlu0 %v1779, 64
  %v1789 = vpop.permute.xlu0 %1788
  %v1791 = vmul.f32 %v1787, %v1789
  %1793 = vrot.lane.b32.xlu0 %v1791, 64
  %v1794 = vpop.permute.xlu0 %1793
  %v1796 = vadd.f32 %v1074, %v1794
  %v1797 = vtanh.pop %v1796
  %v1798 = vsub.f32 1.0, %v1787
  %1800 = vrot.lane.b32.xlu0 %v1797, 96
  %v1801 = vpop.permute.xlu0 %1800
  %v1803 = vmul.f32 %v1798, %v1801
  %v1804 = vrot.slane %v1701, 6
  %v1806 = vmul.f32 %v1787, %v1804
  %v1807 = vadd.f32 %v1803, %v1806
  %v1809 = vrot.slane %v1807, 4
  %1810 = vrot.lane.b32.xlu0 %v1809, 96
  %v1811 = vpop.permute.xlu0 %1810
  %v1812 = vsel %vm134, %v1811, 0
  %1814 = vmatprep.subr.mxu0 0.0
  %1815 = vmatpush1.msra.mxu0 %v983
  %1816 = vmatprep.subr.mxu0 0.0
  %1817 = vmatpush1.msra.mxu0 %v984
  %1818 = vmatprep.subr.mxu0 0.0
  %1819 = vmatpush1.msra.mxu0 %v985
  %1820 = vmatprep.subr.mxu0 0.0
  %1821 = vmatpush1.msra.mxu0 %v986
  %1822 = vmatprep.subr.mxu0 0.0
  %1823 = vmatpush1.msra.mxu0 0.0
  %1824 = vmatprep.subr.mxu0 0.0
  %1825 = vmatpush1.msra.mxu0 0.0
  %1826 = vmatprep.subr.mxu0 0.0
  %1827 = vmatpush1.msra.mxu0 0.0
  %1828 = vmatprep.subr.mxu0 0.0
  %1829 = vmatpush1.msra.mxu0 0.0
  %1830 = vmatprep.subr.mxu0 0.0
  %1831 = vmatpush1.msra.mxu0 0.0
  %1832 = vmatprep.subr.mxu0 0.0
  %1833 = vmatpush1.msra.mxu0 0.0
  %1834 = vmatprep.subr.mxu0 0.0
  %1835 = vmatpush1.msra.mxu0 0.0
  %1836 = vmatprep.subr.mxu0 0.0
  %1837 = vmatpush1.msra.mxu0 0.0
  %1838 = vmatprep.subr.mxu0 0.0
  %1839 = vmatpush1.msra.mxu0 0.0
  %1840 = vmatprep.subr.mxu0 0.0
  %1841 = vmatpush1.msra.mxu0 0.0
  %1842 = vmatprep.subr.mxu0 0.0
  %1843 = vmatpush1.msra.mxu0 0.0
  %1844 = vmatprep.subr.mxu0 0.0
  %1845 = vmatpush1.msra.mxu0 0.0
  %1846 = vmatprep.subr.mxu0 0.0
  %1847 = vmatpush1.msra.mxu0 0.0
  %1848 = vmatprep.subr.mxu0 0.0
  %1849 = vmatpush1.msra.mxu0 0.0
  %1850 = vmatprep.subr.mxu0 0.0
  %1851 = vmatpush1.msra.mxu0 0.0
  %1852 = vmatprep.subr.mxu0 0.0
  %1853 = vmatpush1.msra.mxu0 0.0
  %1854 = vmatprep.subr.mxu0 0.0
  %1855 = vmatpush1.msra.mxu0 0.0
  %1856 = vmatprep.subr.mxu0 0.0
  %1857 = vmatpush1.msra.mxu0 0.0
  %1858 = vmatprep.subr.mxu0 0.0
  %1859 = vmatpush1.msra.mxu0 0.0
  %1860 = vmatprep.subr.mxu0 0.0
  %1861 = vmatpush1.msra.mxu0 0.0
  %1862 = vmatprep.subr.mxu0 0.0
  %1863 = vmatpush1.msra.mxu0 0.0
  %1864 = vmatprep.subr.mxu0 0.0
  %1865 = vmatpush1.msra.mxu0 0.0
  %1866 = vmatprep.subr.mxu0 0.0
  %1867 = vmatpush1.msra.mxu0 0.0
  %1868 = vmatprep.subr.mxu0 0.0
  %1869 = vmatpush1.msra.mxu0 0.0
  %1870 = vmatprep.subr.mxu0 0.0
  %1871 = vmatpush1.msra.mxu0 0.0
  %1872 = vmatprep.subr.mxu0 0.0
  %1873 = vmatpush1.msra.mxu0 0.0
  %1874 = vmatprep.subr.mxu0 0.0
  %1875 = vmatpush1.msra.mxu0 0.0
  %1876 = vmatprep.subr.mxu0 0.0
  %1877 = vmatpush1.msra.mxu0 0.0
  %1878 = vmatprep.mubr.f32.mxu0 0.0
  %1879 = vmatmul.mubr.f32.gmra.mrb[0].mxu0 %v1812
  %v1880 = vpop.f32.mrb[0].mxu0
  %v1881 = vadd.f32 %v1080, %v1880
  %v1882 = vpop.f32.mrb[0].mxu0
  %1883 = vdwg.mxu0
  %v1885 = vrot.slane %v1881, 2
  %v1887 = vadd.f32 %v1074, %v1885
  %v1888 = vxor.u32 %v1887, 2147483648
  %v1889 = vmul.f32 %v1888, 1.442695
  %v1890 = vpow.pop %v1889
  %v1891 = vadd.f32 %v1890, 1.0
  %v1892 = vrcp.pop %v1891
  %v1893 = vmul.f32 1.0, %v1892
  %1894 = vrot.lane.b32.xlu0 %v1885, 64
  %v1895 = vpop.permute.xlu0 %1894
  %v1897 = vmul.f32 %v1893, %v1895
  %1899 = vrot.lane.b32.xlu0 %v1897, 64
  %v1900 = vpop.permute.xlu0 %1899
  %v1902 = vadd.f32 %v1074, %v1900
  %v1903 = vtanh.pop %v1902
  %v1904 = vsub.f32 1.0, %v1893
  %1906 = vrot.lane.b32.xlu0 %v1903, 96
  %v1907 = vpop.permute.xlu0 %1906
  %v1909 = vmul.f32 %v1904, %v1907
  %v1910 = vrot.slane %v1807, 6
  %v1912 = vmul.f32 %v1893, %v1910
  %v1913 = vadd.f32 %v1909, %v1912
  %v1914 = vsel %vm971, %v1176, %v1281
  %v1915 = vsel %vm51, %v1914, %v1387
  %v1916 = vsel %vm974, %v1915, %v1493
  %v1917 = vsel %vm971, %v1596, %v1701
  %v1918 = vsel %vm51, %v1917, %v1807
  %v1919 = vsel %vm974, %v1918, %v1913
  %v1920 = vld [vmem:[%s7] sm:$0xff]
  %v1921 = vld [vmem:[%s7 + $0x8] sm:$0xff]
  %v1922 = vld [vmem:[%s7 + $0x10] sm:$0xff]
  %v1923 = vld [vmem:[%s7 + $0x18] sm:$0xff]
  %v1924 = vld [vmem:[%s8] sm:$0x1]
  %v1926 = vlaneseq
  %v1927 = vshrl.u32 %v1926, 7
  %v1928 = vsub.s32 0, %v1927
  %v1929 = vrot.slane %v1924, %v1928
  %1933 = vrot.lane.b32.xlu0 %v1916, 96
  %v1934 = vpop.permute.xlu0 %1933
  %1935 = vrot.lane.b32.xlu0 %v1919, 96
  %v1936 = vpop.permute.xlu0 %1935
  %v1937 = vsel %vm134, %v1934, 0
  %v1939 = vsel %vm134, %v1936, 0
  %1941 = vmatprep.subr.mxu0 0.0
  %1942 = vmatpush1.msra.mxu0 %v1920
  %1943 = vmatprep.subr.mxu0 0.0
  %1944 = vmatpush1.msra.mxu0 %v1921
  %1945 = vmatprep.subr.mxu0 0.0
  %1946 = vmatpush1.msra.mxu0 %v1922
  %1947 = vmatprep.subr.mxu0 0.0
  %1948 = vmatpush1.msra.mxu0 %v1923
  %1949 = vmatprep.subr.mxu0 0.0
  %1950 = vmatpush1.msra.mxu0 0.0
  %1951 = vmatprep.subr.mxu0 0.0
  %1952 = vmatpush1.msra.mxu0 0.0
  %1953 = vmatprep.subr.mxu0 0.0
  %1954 = vmatpush1.msra.mxu0 0.0
  %1955 = vmatprep.subr.mxu0 0.0
  %1956 = vmatpush1.msra.mxu0 0.0
  %1957 = vmatprep.subr.mxu0 0.0
  %1958 = vmatpush1.msra.mxu0 0.0
  %1959 = vmatprep.subr.mxu0 0.0
  %1960 = vmatpush1.msra.mxu0 0.0
  %1961 = vmatprep.subr.mxu0 0.0
  %1962 = vmatpush1.msra.mxu0 0.0
  %1963 = vmatprep.subr.mxu0 0.0
  %1964 = vmatpush1.msra.mxu0 0.0
  %1965 = vmatprep.subr.mxu0 0.0
  %1966 = vmatpush1.msra.mxu0 0.0
  %1967 = vmatprep.subr.mxu0 0.0
  %1968 = vmatpush1.msra.mxu0 0.0
  %1969 = vmatprep.subr.mxu0 0.0
  %1970 = vmatpush1.msra.mxu0 0.0
  %1971 = vmatprep.subr.mxu0 0.0
  %1972 = vmatpush1.msra.mxu0 0.0
  %1973 = vmatprep.subr.mxu0 0.0
  %1974 = vmatpush1.msra.mxu0 0.0
  %1975 = vmatprep.subr.mxu0 0.0
  %1976 = vmatpush1.msra.mxu0 0.0
  %1977 = vmatprep.subr.mxu0 0.0
  %1978 = vmatpush1.msra.mxu0 0.0
  %1979 = vmatprep.subr.mxu0 0.0
  %1980 = vmatpush1.msra.mxu0 0.0
  %1981 = vmatprep.subr.mxu0 0.0
  %1982 = vmatpush1.msra.mxu0 0.0
  %1983 = vmatprep.subr.mxu0 0.0
  %1984 = vmatpush1.msra.mxu0 0.0
  %1985 = vmatprep.subr.mxu0 0.0
  %1986 = vmatpush1.msra.mxu0 0.0
  %1987 = vmatprep.subr.mxu0 0.0
  %1988 = vmatpush1.msra.mxu0 0.0
  %1989 = vmatprep.subr.mxu0 0.0
  %1990 = vmatpush1.msra.mxu0 0.0
  %1991 = vmatprep.subr.mxu0 0.0
  %1992 = vmatpush1.msra.mxu0 0.0
  %1993 = vmatprep.subr.mxu0 0.0
  %1994 = vmatpush1.msra.mxu0 0.0
  %1995 = vmatprep.subr.mxu0 0.0
  %1996 = vmatpush1.msra.mxu0 0.0
  %1997 = vmatprep.subr.mxu0 0.0
  %1998 = vmatpush1.msra.mxu0 0.0
  %1999 = vmatprep.subr.mxu0 0.0
  %2000 = vmatpush1.msra.mxu0 0.0
  %2001 = vmatprep.subr.mxu0 0.0
  %2002 = vmatpush1.msra.mxu0 0.0
  %2003 = vmatprep.subr.mxu0 0.0
  %2004 = vmatpush1.msra.mxu0 0.0
  %2005 = vmatprep.mubr.f32.mxu0 0.0
  %2006 = vmatmul.mubr.f32.gmra.mrb[0].mxu0 %v1937
  %v2007 = vpop.f32.mrb[0].mxu0
  %v2008 = vadd.f32 %v1929, %v2007
  %v2009 = vpop.f32.mrb[0].mxu0
  %2010 = vmatprep.mubr.f32.mxu0 0.0
  %2011 = vmatmul.mubr.f32.gmra.mrb[0].mxu0 %v1939
  %v2012 = vpop.f32.mrb[0].mxu0
  %v2013 = vadd.f32 %v1929, %v2012
  %v2014 = vpop.f32.mrb[0].mxu0
  %2015 = vdwg.mxu0
  %2016 = vst.msk [vmem:[%s9] sm:$0xff] %vm44, %v2008
  %2017 = vst.msk [vmem:[%s9 + $0x8] sm:$0xff] %vm44, %v2013
  // Predicated region
  $region38: #{reconstruction_model_forward.1} parent=0 // pred_check
    _
  $region39: #{reconstruction_model_forward.1} parent=0 // pred_check_branch
    %2019 = sbr.rel (0) target = $region41
  $region40: #{reconstruction_model_forward.1} parent=0 // pred_region
    _
  $region41: #{reconstruction_model_forward.1} parent=0 // pred_fallthru
    _
  // Predicated region
  $region42: #{reconstruction_model_forward.1} parent=0 // pred_check
    _
  $region43: #{reconstruction_model_forward.1} parent=0 // pred_check_branch
    %2021 = sbr.rel (0) target = $region45
  $region44: #{reconstruction_model_forward.1} parent=0 // pred_region
    _
  $region45: #{reconstruction_model_forward.1} parent=0 // pred_fallthru
    _

</llo_original>
